<compile_context>
chip_gen: v6e
topology: v6e:2x2x1
jax: 0.10.0
libtpu: 0.0.40
codegen_flags: <defaults>
</compile_context>

<pallas_src>
import math

import jax
import jax.numpy as jnp
import numpy as np
from jax import lax
from jax.experimental import pallas as pl
from jax.experimental.pallas import tpu as pltpu


K1, S1 = 8, 4        # conv1 kernel / stride
K2, S2 = 4, 2        # conv2 kernel / stride
C1 = 16              # conv1 output channels
C2 = 32              # conv2 output channels


def get_conv_out_size(h, w, kernel_size, stride):
    return ((h - kernel_size[0]) // stride[0] + 1,
            (w - kernel_size[1]) // stride[1] + 1)


def _ceil_to(x, m):
    return -(-x // m) * m


# ---------------------------------------------------------------------------
# Fused forward kernel.
#   x_ref  : (hu, wu, TB, S1*S1*cin)  space-to-depth(4) input block  (f32)
#   w1_ref : (S1*S1*cin, 4*C1)        conv1 weights, (u,v,c) x (di,dj,o)  (bf16)
#   b1_ref : (1, 4*C1)                conv1 bias tiled over the 2x2 s2d cell
#   w2_ref : (4*C1, 4*C2)             conv2 weights, (u,v,c) x (di,dj,o)  (bf16)
#   b2_ref : (1, h2*w2*C2)            conv2 bias tiled over output positions
#   w3_ref : (h2*w2*C2, out_dim)      linear weights, rows in (p, q, c) order (bf16)
#   b3_ref : (1, out_dim)
#   o_ref  : (TB, out_dim)            (f32)
# ---------------------------------------------------------------------------
def _conv4_fused_kernel(x_ref, w1_ref, b1_ref, w2_ref, b2_ref, w3_ref, b3_ref,
                        o_ref):
    hu, wu, tb, cs = x_ref.shape
    h2 = (hu - 3) // 2
    w2 = (wu - 3) // 2
    hy, wy = hu - 1, wu - 1                       # = 2*(h2+1): conv1 rows used

    # ---- conv1 (8x8, stride 4) == stride-1 2x2 conv on the space-to-depth
    #      input: one bf16 GEMM (K=48, N=64) + 4 whole-array shifted adds.
    x2d = x_ref[...].astype(jnp.bfloat16).reshape(hu * wu * tb, cs)
    z1 = jnp.dot(x2d, w1_ref[...], preferred_element_type=jnp.float32)
    z1 = z1.reshape(hu, wu, tb, 4 * C1)

    acc1 = (z1[0:hy, 0:wy, :, 0 * C1:1 * C1]
            + z1[0:hy, 1:wy + 1, :, 1 * C1:2 * C1]
            + z1[1:hy + 1, 0:wy, :, 2 * C1:3 * C1]
            + z1[1:hy + 1, 1:wy + 1, :, 3 * C1:4 * C1])   # (hy, wy, tb, C1)

    # ---- conv2 input: space-to-depth(2) of the conv1 output.  hy = 2*(h2+1),
    #      so the split is a pure leading-dim reshape; conv1 bias + ReLU are
    #      applied after the lane-concat so the VPU runs on 64-lane data.
    a1r = acc1.reshape(h2 + 1, 2, w2 + 1, 2, tb, C1)
    pre1 = jnp.concatenate(
        [a1r[:, 0, :, 0], a1r[:, 0, :, 1], a1r[:, 1, :, 0], a1r[:, 1, :, 1]],
        axis=-1)                                          # (h2+1, w2+1, tb, 4*C1)
    y1sd = jnp.maximum(pre1 + b1_ref[...], 0.0).astype(jnp.bfloat16)

    # ---- conv2 (4x4, stride 2) == stride-1 2x2 conv on y1sd: one bf16 GEMM
    #      (K=64, N=128 lane-dense) + 4 whole-array shifted adds.
    z2 = jnp.dot(y1sd.reshape((h2 + 1) * (w2 + 1) * tb, 4 * C1), w2_ref[...],
                 preferred_element_type=jnp.float32)
    z2 = z2.reshape(h2 + 1, w2 + 1, tb, 4 * C2)

    acc2 = (z2[0:h2, 0:w2, :, 0 * C2:1 * C2]
            + z2[0:h2, 1:w2 + 1, :, 1 * C2:2 * C2]
            + z2[1:h2 + 1, 0:w2, :, 2 * C2:3 * C2]
            + z2[1:h2 + 1, 1:w2 + 1, :, 3 * C2:4 * C2])   # (h2, w2, tb, C2)

    # ---- flatten to (TB, h2*w2*C2) in (p, q, c) order (lane-dense), then one
    #      bias+ReLU and ONE GEMM for the linear layer.
    pre2 = jnp.concatenate(
        [acc2[p, q] for p in range(h2) for q in range(w2)], axis=-1)
    h_flat = jnp.maximum(pre2 + b2_ref[...], 0.0).astype(jnp.bfloat16)

    out = jnp.dot(h_flat, w3_ref[...], preferred_element_type=jnp.float32)
    o_ref[...] = (out + b3_ref[...]).astype(o_ref.dtype)


# ---------------------------------------------------------------------------
# One-time exact parameter repacking (outside the forward pass).
# ---------------------------------------------------------------------------
def pack_params(params, height, width, out_dim):
    w1, b1, w2, b2, w3, b3 = params
    cin = w1.shape[1]
    h1, w1o = get_conv_out_size(height, width, (K1, K1), (S1, S1))
    h2, w2o = get_conv_out_size(h1, w1o, (K2, K2), (S2, S2))

    # conv1: rows (u, v, c) over the 4x4 space-to-depth cell, cols (di, dj, o)
    # over the 2x2 kernel-position blocks.
    # w1cat[u*S1*cin + v*cin + c, (di*2+dj)*C1 + o] = w1[o, c, S1*di+u, S1*dj+v]
    w1r = w1.reshape(C1, cin, 2, S1, 2, S1)                 # (o, c, di, u, dj, v)
    w1cat = jnp.transpose(w1r, (3, 5, 1, 2, 4, 0)).reshape(S1 * S1 * cin, 4 * C1)

    # conv2: rows (u, v, c) over the 2x2 space-to-depth cell of the conv1
    # output, cols (di, dj, o) over the 2x2 kernel-position blocks.
    # w2cat[(u*2+v)*C1 + c, (di*2+dj)*C2 + o] = w2[o, c, 2*di+u, 2*dj+v]
    w2r = w2.reshape(C2, C1, 2, 2, 2, 2)                    # (o, c, di, u, dj, v)
    w2cat = jnp.transpose(w2r, (3, 5, 1, 2, 4, 0)).reshape(4 * C1, 4 * C2)

    # linear: rows reordered from PyTorch's (c, p, q) flatten to our (p, q, c).
    w3r = w3.reshape(out_dim, C2, h2, w2o)                  # (o, c, p, q)
    w3p = jnp.transpose(w3r, (2, 3, 1, 0)).reshape(h2 * w2o * C2, out_dim)

    b1t = jnp.tile(b1.reshape(1, C1), (1, 4))               # per s2d-cell block
    b2t = jnp.tile(b2.reshape(1, C2), (1, h2 * w2o))        # per output position

    return (w1cat.astype(jnp.bfloat16),
            b1t.astype(jnp.float32),
            w2cat.astype(jnp.bfloat16),
            b2t.astype(jnp.float32),
            w3p.astype(jnp.bfloat16),
            b3.reshape(1, out_dim).astype(jnp.float32))


# ---------------------------------------------------------------------------
# Batch-tile selection: big enough for MXU row occupancy / DMA efficiency,
# small enough to (a) stay within a ~20 MiB per-step VMEM budget (safe for
# v7x's 64 MiB) and (b) keep >= 2 grid steps so ("parallel",) can split the
# grid across v7x's two TensorCores and overlap DMA with compute.
# ---------------------------------------------------------------------------
def _choose_batch_tile(batch, hu, wu, h2, w2, cs):
    per_img = 4 * (2 * hu * wu * cs                       # x (double-buffered)
                   + hu * wu * 4 * C1                     # z1
                   + (hu - 1) * (wu - 1) * C1             # acc1
                   + 2 * (h2 + 1) * (w2 + 1) * (4 * C1 + 4 * C2)   # pre1/y1sd/z2
                   + 3 * h2 * w2 * C2)                    # acc2/pre2/h_flat
    cap = max(8, min(128, ((20 * 1024 * 1024) // per_img) // 8 * 8))
    b8 = max(8, _ceil_to(batch, 8))
    tb = min(cap, b8)
    if b8 > 8 and b8 // tb < 2:
        tb = min(tb, max(8, _ceil_to(b8 // 2, 8)))
    return tb


# ---------------------------------------------------------------------------
# Forward wrapper: byte-preserving layout transform + one fused pallas_call.
# ---------------------------------------------------------------------------
def conv4_encoder_forward(img, packed):
    """img: (B, 3, H, W) float32 NCHW -> (B, out_dim) float32."""
    w1cat, b1t, w2cat, b2t, w3p, b3 = packed
    out_dim = b3.shape[-1]
    B, cin, H, W = img.shape
    h1, w1 = get_conv_out_size(H, W, (K1, K1), (S1, S1))
    h2, w2 = get_conv_out_size(h1, w1, (K2, K2), (S2, S2))
    hu, wu = 2 * h2 + 3, 2 * w2 + 3          # space-to-depth blocks actually used
    hc, wc = hu * S1, wu * S1                # input rows/cols actually used
    cs = S1 * S1 * cin

    # (B, C, H, W) -> (hu, wu, B, S1*S1*C): pure layout work, same byte count.
    # Batch stays in the second-minor position so every in-kernel window
    # selection is a leading-dim slice over an aligned (TB, C) minor tile.
    x = jnp.transpose(img[:, :, :hc, :wc], (0, 2, 3, 1))       # (B, hc, wc, C)
    x = x.reshape(B, hu, S1, wu, S1, cin)
    x = jnp.transpose(x, (1, 3, 0, 2, 4, 5)).reshape(hu, wu, B, cs)

    tb = _choose_batch_tile(B, hu, wu, h2, w2, cs)
    Bp = _ceil_to(B, tb)
    if Bp != B:
        x = jnp.pad(x, ((0, 0), (0, 0), (0, Bp - B), (0, 0)))

    cost = pl.CostEstimate(
        flops=2 * Bp * (hu * wu * cs * (4 * C1)
                        + (h2 + 1) * (w2 + 1) * (4 * C1) * (4 * C2)
                        + h2 * w2 * C2 * out_dim),
        transcendentals=0,
        bytes_accessed=(4 * x.size
                        + 2 * (w1cat.size + w2cat.size + w3p.size)
                        + 4 * (b1t.size + b2t.size + b3.size)
                        + 4 * Bp * out_dim))

    out = pl.pallas_call(
        _conv4_fused_kernel,
        out_shape=jax.ShapeDtypeStruct((Bp, out_dim), jnp.float32),
        grid=(Bp // tb,),
        in_specs=[
            pl.BlockSpec((hu, wu, tb, cs), lambda b: (0, 0, b, 0)),
            pl.BlockSpec(w1cat.shape, lambda b: (0, 0)),
            pl.BlockSpec(b1t.shape, lambda b: (0, 0)),
            pl.BlockSpec(w2cat.shape, lambda b: (0, 0)),
            pl.BlockSpec(b2t.shape, lambda b: (0, 0)),
            pl.BlockSpec(w3p.shape, lambda b: (0, 0)),
            pl.BlockSpec(b3.shape, lambda b: (0, 0)),
        ],
        out_specs=pl.BlockSpec((tb, out_dim), lambda b: (b, 0)),
        compiler_params=pltpu.CompilerParams(
            dimension_semantics=("parallel",),
            vmem_limit_bytes=64 * 1024 * 1024),
        cost_estimate=cost,
    )(x, w1cat, b1t, w2cat, b2t, w3p, b3)
    return out[:B]


# ---------------------------------------------------------------------------
# Parameter init (PyTorch-style uniform) and pure-JAX reference.
# ---------------------------------------------------------------------------
def init_params(key, height, width, out_dim):
    h1, w1_ = get_conv_out_size(height, width, (K1, K1), (S1, S1))
    h2, w2_ = get_conv_out_size(h1, w1_, (K2, K2), (S2, S2))
    dynamic_size = h2 * w2_ * C2

    keys = jax.random.split(key, 6)

    def uni(k, shape, fan_in):
        bound = 1.0 / math.sqrt(fan_in)
        return jax.random.uniform(k, shape, jnp.float32, -bound, bound)

    w1 = uni(keys[0], (C1, 3, K1, K1), 3 * K1 * K1)
    b1 = uni(keys[1], (C1,), 3 * K1 * K1)
    w2 = uni(keys[2], (C2, C1, K2, K2), C1 * K2 * K2)
    b2 = uni(keys[3], (C2,), C1 * K2 * K2)
    w3 = uni(keys[4], (out_dim, dynamic_size), dynamic_size)
    b3 = uni(keys[5], (out_dim,), dynamic_size)
    return (w1, b1, w2, b2, w3, b3), dynamic_size


def reference_forward(img, params):
    w1, b1, w2, b2, w3, b3 = params
    dn = ("NCHW", "OIHW", "NCHW")
    y = lax.conv_general_dilated(img, w1, (S1, S1), "VALID", dimension_numbers=dn)
    y = jnp.maximum(y + b1[None, :, None, None], 0.0)
    y = lax.conv_general_dilated(y, w2, (S2, S2), "VALID", dimension_numbers=dn)
    y = jnp.maximum(y + b2[None, :, None, None], 0.0)
    y = y.reshape(y.shape[0], -1)
    return y @ w3.T + b3


if __name__ == "__main__":
    batch = 32                 # -> TB=16, two grid steps (exercises the parallel grid)
    height = width = 32
    out_dim = 128              # lane-dense output last dim

    key = jax.random.PRNGKey(0)
    k_img, k_par = jax.random.split(key)
    img = jax.random.normal(k_img, (batch, 3, height, width), jnp.float32)

    params, dynamic_size = init_params(k_par, height, width, out_dim)
    packed = pack_params(params, height, width, out_dim)

    fwd = jax.jit(conv4_encoder_forward)
    out = jax.block_until_ready(fwd(img, packed))
    assert out.shape == (batch, out_dim), out.shape

    ref = jax.block_until_ready(reference_forward(img, params))
    # bf16 MXU inputs with f32 accumulation -> relaxed (but still tight) tolerance.
    np.testing.assert_allclose(np.asarray(out), np.asarray(ref), rtol=2e-2, atol=2e-2)

    print("KERNEL_OK")
</pallas_src>

<mosaic_0001>
module attributes {stable_mosaic.version = 11 : i64} {
  func.func @_conv4_fused_kernel(%arg0: i32, %arg1: memref<7x7x16x48xf32, #tpu.memory_space<vmem>>, %arg2: memref<48x64xbf16, #tpu.memory_space<vmem>>, %arg3: memref<1x64xf32, #tpu.memory_space<vmem>>, %arg4: memref<64x128xbf16, #tpu.memory_space<vmem>>, %arg5: memref<1x128xf32, #tpu.memory_space<vmem>>, %arg6: memref<128x128xbf16, #tpu.memory_space<vmem>>, %arg7: memref<1x128xf32, #tpu.memory_space<vmem>>, %arg8: memref<16x128xf32, #tpu.memory_space<vmem>>) attributes {dimension_semantics = [#tpu.dimension_semantics<parallel>], iteration_bounds = array<i64: 2>, scalar_prefetch = 0 : i64, scratch_operands = 0 : i64, tpu.core_type = #tpu.core_type<tc>, window_params = [{transform_indices = @transform_0, window_bounds = array<i64: 7, 7, 16, 48>}, {pipeline_mode = #tpu.pipeline_mode<synchronous>, transform_indices = @transform_1, window_bounds = array<i64: 48, 64>}, {pipeline_mode = #tpu.pipeline_mode<synchronous>, transform_indices = @transform_2, window_bounds = array<i64: 1, 64>}, {pipeline_mode = #tpu.pipeline_mode<synchronous>, transform_indices = @transform_3, window_bounds = array<i64: 64, 128>}, {pipeline_mode = #tpu.pipeline_mode<synchronous>, transform_indices = @transform_4, window_bounds = array<i64: 1, 128>}, {pipeline_mode = #tpu.pipeline_mode<synchronous>, transform_indices = @transform_5, window_bounds = array<i64: 128, 128>}, {pipeline_mode = #tpu.pipeline_mode<synchronous>, transform_indices = @transform_6, window_bounds = array<i64: 1, 128>}, {transform_indices = @transform_7, window_bounds = array<i64: 16, 128>}]} {
    %c0 = arith.constant 0 : index
    %c0_0 = arith.constant 0 : index
    %c0_1 = arith.constant 0 : index
    %c0_2 = arith.constant 0 : index
    %0 = vector.load %arg1[%c0, %c0_0, %c0_1, %c0_2] : memref<7x7x16x48xf32, #tpu.memory_space<vmem>>, vector<7x7x16x48xf32>
    %1 = arith.truncf %0 : vector<7x7x16x48xf32> to vector<7x7x16x48xbf16>
    %2 = vector.shape_cast %1 : vector<7x7x16x48xbf16> to vector<784x48xbf16>
    %c0_3 = arith.constant 0 : index
    %c0_4 = arith.constant 0 : index
    %3 = vector.load %arg2[%c0_3, %c0_4] : memref<48x64xbf16, #tpu.memory_space<vmem>>, vector<48x64xbf16>
    %cst = arith.constant dense<0.000000e+00> : vector<784x64xf32>
    %4 = tpu.matmul %2, %3, %cst {dimension_numbers = #tpu.dot_dimension_numbers<[1], [0], [0], [1], [0, 0, 1, 1], [], []>} : vector<784x48xbf16>, vector<48x64xbf16>, vector<784x64xf32> -> vector<784x64xf32>
    %5 = vector.shape_cast %4 : vector<784x64xf32> to vector<7x7x16x64xf32>
    %6 = vector.extract_strided_slice %5 {offsets = [0, 0, 0, 0], sizes = [6, 6, 16, 16], strides = [1, 1, 1, 1]} : vector<7x7x16x64xf32> to vector<6x6x16x16xf32>
    %7 = vector.extract_strided_slice %5 {offsets = [0, 1, 0, 16], sizes = [6, 6, 16, 16], strides = [1, 1, 1, 1]} : vector<7x7x16x64xf32> to vector<6x6x16x16xf32>
    %8 = arith.addf %6, %7 : vector<6x6x16x16xf32>
    %9 = vector.extract_strided_slice %5 {offsets = [1, 0, 0, 32], sizes = [6, 6, 16, 16], strides = [1, 1, 1, 1]} : vector<7x7x16x64xf32> to vector<6x6x16x16xf32>
    %10 = arith.addf %8, %9 : vector<6x6x16x16xf32>
    %11 = vector.extract_strided_slice %5 {offsets = [1, 1, 0, 48], sizes = [6, 6, 16, 16], strides = [1, 1, 1, 1]} : vector<7x7x16x64xf32> to vector<6x6x16x16xf32>
    %12 = arith.addf %10, %11 : vector<6x6x16x16xf32>
    %13 = vector.shape_cast %12 : vector<6x6x16x16xf32> to vector<3x2x3x2x16x16xf32>
    %14 = vector.extract_strided_slice %13 {offsets = [0, 0, 0, 0, 0, 0], sizes = [3, 1, 3, 1, 16, 16], strides = [1, 1, 1, 1, 1, 1]} : vector<3x2x3x2x16x16xf32> to vector<3x1x3x1x16x16xf32>
    %15 = vector.shape_cast %14 : vector<3x1x3x1x16x16xf32> to vector<3x3x16x16xf32>
    %16 = vector.extract_strided_slice %13 {offsets = [0, 0, 0, 1, 0, 0], sizes = [3, 1, 3, 1, 16, 16], strides = [1, 1, 1, 1, 1, 1]} : vector<3x2x3x2x16x16xf32> to vector<3x1x3x1x16x16xf32>
    %17 = vector.shape_cast %16 : vector<3x1x3x1x16x16xf32> to vector<3x3x16x16xf32>
    %18 = vector.extract_strided_slice %13 {offsets = [0, 1, 0, 0, 0, 0], sizes = [3, 1, 3, 1, 16, 16], strides = [1, 1, 1, 1, 1, 1]} : vector<3x2x3x2x16x16xf32> to vector<3x1x3x1x16x16xf32>
    %19 = vector.shape_cast %18 : vector<3x1x3x1x16x16xf32> to vector<3x3x16x16xf32>
    %20 = vector.extract_strided_slice %13 {offsets = [0, 1, 0, 1, 0, 0], sizes = [3, 1, 3, 1, 16, 16], strides = [1, 1, 1, 1, 1, 1]} : vector<3x2x3x2x16x16xf32> to vector<3x1x3x1x16x16xf32>
    %21 = vector.shape_cast %20 : vector<3x1x3x1x16x16xf32> to vector<3x3x16x16xf32>
    %22 = tpu.concatenate %15, %17, %19, %21 in 3 : vector<3x3x16x16xf32>, vector<3x3x16x16xf32>, vector<3x3x16x16xf32>, vector<3x3x16x16xf32> -> vector<3x3x16x64xf32>
    %c0_5 = arith.constant 0 : index
    %c0_6 = arith.constant 0 : index
    %23 = vector.load %arg3[%c0_5, %c0_6] : memref<1x64xf32, #tpu.memory_space<vmem>>, vector<1x64xf32>
    %24 = vector.shape_cast %23 : vector<1x64xf32> to vector<1x1x1x64xf32>
    %25 = vector.broadcast %24 : vector<1x1x1x64xf32> to vector<3x3x16x64xf32>
    %26 = arith.addf %22, %25 : vector<3x3x16x64xf32>
    %cst_7 = arith.constant 0.000000e+00 : f32
    %27 = vector.broadcast %cst_7 : f32 to vector<3x3x16x64xf32>
    %28 = arith.maximumf %26, %27 : vector<3x3x16x64xf32>
    %29 = arith.truncf %28 : vector<3x3x16x64xf32> to vector<3x3x16x64xbf16>
    %30 = vector.shape_cast %29 : vector<3x3x16x64xbf16> to vector<144x64xbf16>
    %c0_8 = arith.constant 0 : index
    %c0_9 = arith.constant 0 : index
    %31 = vector.load %arg4[%c0_8, %c0_9] : memref<64x128xbf16, #tpu.memory_space<vmem>>, vector<64x128xbf16>
    %cst_10 = arith.constant dense<0.000000e+00> : vector<144x128xf32>
    %32 = tpu.matmul %30, %31, %cst_10 {dimension_numbers = #tpu.dot_dimension_numbers<[1], [0], [0], [1], [0, 0, 1, 1], [], []>} : vector<144x64xbf16>, vector<64x128xbf16>, vector<144x128xf32> -> vector<144x128xf32>
    %33 = vector.shape_cast %32 : vector<144x128xf32> to vector<3x3x16x128xf32>
    %34 = vector.extract_strided_slice %33 {offsets = [0, 0, 0, 0], sizes = [2, 2, 16, 32], strides = [1, 1, 1, 1]} : vector<3x3x16x128xf32> to vector<2x2x16x32xf32>
    %35 = vector.extract_strided_slice %33 {offsets = [0, 1, 0, 32], sizes = [2, 2, 16, 32], strides = [1, 1, 1, 1]} : vector<3x3x16x128xf32> to vector<2x2x16x32xf32>
    %36 = arith.addf %34, %35 : vector<2x2x16x32xf32>
    %37 = vector.extract_strided_slice %33 {offsets = [1, 0, 0, 64], sizes = [2, 2, 16, 32], strides = [1, 1, 1, 1]} : vector<3x3x16x128xf32> to vector<2x2x16x32xf32>
    %38 = arith.addf %36, %37 : vector<2x2x16x32xf32>
    %39 = vector.extract_strided_slice %33 {offsets = [1, 1, 0, 96], sizes = [2, 2, 16, 32], strides = [1, 1, 1, 1]} : vector<3x3x16x128xf32> to vector<2x2x16x32xf32>
    %40 = arith.addf %38, %39 : vector<2x2x16x32xf32>
    %41 = vector.extract_strided_slice %40 {offsets = [0, 0, 0, 0], sizes = [1, 1, 16, 32], strides = [1, 1, 1, 1]} : vector<2x2x16x32xf32> to vector<1x1x16x32xf32>
    %42 = vector.shape_cast %41 : vector<1x1x16x32xf32> to vector<16x32xf32>
    %43 = vector.extract_strided_slice %40 {offsets = [0, 1, 0, 0], sizes = [1, 1, 16, 32], strides = [1, 1, 1, 1]} : vector<2x2x16x32xf32> to vector<1x1x16x32xf32>
    %44 = vector.shape_cast %43 : vector<1x1x16x32xf32> to vector<16x32xf32>
    %45 = vector.extract_strided_slice %40 {offsets = [1, 0, 0, 0], sizes = [1, 1, 16, 32], strides = [1, 1, 1, 1]} : vector<2x2x16x32xf32> to vector<1x1x16x32xf32>
    %46 = vector.shape_cast %45 : vector<1x1x16x32xf32> to vector<16x32xf32>
    %47 = vector.extract_strided_slice %40 {offsets = [1, 1, 0, 0], sizes = [1, 1, 16, 32], strides = [1, 1, 1, 1]} : vector<2x2x16x32xf32> to vector<1x1x16x32xf32>
    %48 = vector.shape_cast %47 : vector<1x1x16x32xf32> to vector<16x32xf32>
    %49 = tpu.concatenate %42, %44, %46, %48 in 1 : vector<16x32xf32>, vector<16x32xf32>, vector<16x32xf32>, vector<16x32xf32> -> vector<16x128xf32>
    %c0_11 = arith.constant 0 : index
    %c0_12 = arith.constant 0 : index
    %50 = vector.load %arg5[%c0_11, %c0_12] : memref<1x128xf32, #tpu.memory_space<vmem>>, vector<1x128xf32>
    %51 = vector.broadcast %50 : vector<1x128xf32> to vector<16x128xf32>
    %52 = arith.addf %49, %51 : vector<16x128xf32>
    %cst_13 = arith.constant 0.000000e+00 : f32
    %53 = vector.broadcast %cst_13 : f32 to vector<16x128xf32>
    %54 = arith.maximumf %52, %53 : vector<16x128xf32>
    %55 = arith.truncf %54 : vector<16x128xf32> to vector<16x128xbf16>
    %c0_14 = arith.constant 0 : index
    %c0_15 = arith.constant 0 : index
    %56 = vector.load %arg6[%c0_14, %c0_15] : memref<128x128xbf16, #tpu.memory_space<vmem>>, vector<128x128xbf16>
    %cst_16 = arith.constant dense<0.000000e+00> : vector<16x128xf32>
    %57 = tpu.matmul %55, %56, %cst_16 {dimension_numbers = #tpu.dot_dimension_numbers<[1], [0], [0], [1], [0, 0, 1, 1], [], []>} : vector<16x128xbf16>, vector<128x128xbf16>, vector<16x128xf32> -> vector<16x128xf32>
    %c0_17 = arith.constant 0 : index
    %c0_18 = arith.constant 0 : index
    %58 = vector.load %arg7[%c0_17, %c0_18] : memref<1x128xf32, #tpu.memory_space<vmem>>, vector<1x128xf32>
    %59 = vector.broadcast %58 : vector<1x128xf32> to vector<16x128xf32>
    %60 = arith.addf %57, %59 : vector<16x128xf32>
    %c0_19 = arith.constant 0 : index
    %c0_20 = arith.constant 0 : index
    %61 = vector.load %arg8[%c0_19, %c0_20] : memref<16x128xf32, #tpu.memory_space<vmem>>, vector<16x128xf32>
    tpu.vector_store %arg8[%c0_19, %c0_20], %60 {strides = array<i32>} : memref<16x128xf32, #tpu.memory_space<vmem>>, vector<16x128xf32>,
    return
  }
  func.func @transform_0(%arg0: i32) -> (i32, i32, i32, i32) {
    %c0_i32 = arith.constant 0 : i32
    %c0_i32_0 = arith.constant 0 : i32
    %c0_i32_1 = arith.constant 0 : i32
    %c0_i32_2 = arith.constant 0 : i32
    return %c0_i32, %c0_i32_0, %arg0, %c0_i32_1 : i32, i32, i32, i32
  }
  func.func @transform_1(%arg0: i32) -> (i32, i32) {
    %c0_i32 = arith.constant 0 : i32
    %c0_i32_0 = arith.constant 0 : i32
    %c0_i32_1 = arith.constant 0 : i32
    return %c0_i32, %c0_i32_0 : i32, i32
  }
  func.func @transform_2(%arg0: i32) -> (i32, i32) {
    %c0_i32 = arith.constant 0 : i32
    %c0_i32_0 = arith.constant 0 : i32
    %c0_i32_1 = arith.constant 0 : i32
    return %c0_i32, %c0_i32_0 : i32, i32
  }
  func.func @transform_3(%arg0: i32) -> (i32, i32) {
    %c0_i32 = arith.constant 0 : i32
    %c0_i32_0 = arith.constant 0 : i32
    %c0_i32_1 = arith.constant 0 : i32
    return %c0_i32, %c0_i32_0 : i32, i32
  }
  func.func @transform_4(%arg0: i32) -> (i32, i32) {
    %c0_i32 = arith.constant 0 : i32
    %c0_i32_0 = arith.constant 0 : i32
    %c0_i32_1 = arith.constant 0 : i32
    return %c0_i32, %c0_i32_0 : i32, i32
  }
  func.func @transform_5(%arg0: i32) -> (i32, i32) {
    %c0_i32 = arith.constant 0 : i32
    %c0_i32_0 = arith.constant 0 : i32
    %c0_i32_1 = arith.constant 0 : i32
    return %c0_i32, %c0_i32_0 : i32, i32
  }
  func.func @transform_6(%arg0: i32) -> (i32, i32) {
    %c0_i32 = arith.constant 0 : i32
    %c0_i32_0 = arith.constant 0 : i32
    %c0_i32_1 = arith.constant 0 : i32
    return %c0_i32, %c0_i32_0 : i32, i32
  }
  func.func @transform_7(%arg0: i32) -> (i32, i32) {
    %c0_i32 = arith.constant 0 : i32
    %c0_i32_0 = arith.constant 0 : i32
    return %arg0, %c0_i32 : i32, i32
  }
}

</mosaic_0001>

<llo_original>
// kernel: conv4_encoder_forward.1
$region0: #{conv4_encoder_forward.1}
  #allocation0 [shape = 'u32[]', space=smem, size = 0x4, offset = 0x4, fixed_abs, tag = 'smem constant byte address 0x4 - core index']
  #allocation1 [shape = 'u32[144,128]{1,0:T(1,128)}', space=vmem, size = 0x12000, scoped, tag = 'internal scratch']
  %s0 = inlined_call_operand.vmem [shape: f32[7,7,32,48], index: 0, kind: input, shape index: {}]
  %s1 = inlined_call_operand.vmem [shape: bf16[48,64], index: 1, kind: input, shape index: {}]
  %s2 = inlined_call_operand.vmem [shape: f32[1,64], index: 2, kind: input, shape index: {}]
  %s3 = inlined_call_operand.vmem [shape: bf16[64,128], index: 3, kind: input, shape index: {}]
  %s4 = inlined_call_operand.vmem [shape: f32[1,128], index: 4, kind: input, shape index: {}]
  %s5 = inlined_call_operand.vmem [shape: bf16[128,128], index: 5, kind: input, shape index: {}]
  %s6 = inlined_call_operand.vmem [shape: f32[1,128], index: 6, kind: input, shape index: {}]
  %s7 = inlined_call_operand.hbm [shape: f32[32,128], index: 7, kind: output, shape index: {}]
  %s8 = sld [smem:[#allocation0]]
  $region99: #{conv4_encoder_forward.1} parent=0
    _
  %s10 = ssub.s32 1, %s8
  %s11 = scalar_select 0, %s10, %s8
  $region1: #{conv4_encoder_forward.1} parent=0
    #allocation2 [shape = 'u8[802816]{0}', space=vmem, size = 0xc4000, scoped, tag = 'input window, operand 0']
    #allocation3 [shape = 'u8[16384]{0}', space=vmem, size = 0x4000, scoped, tag = 'output window, operand 0']
    #allocation4 [shape = 's32[2]{0}', space=sflag, size = 0x8, scoped, tag = 'scoped memory for conv4_encoder_forward.1']
    %12 = vsyncpa [#allocation4], 0
    %s13 = scalar_lea.sflag [#allocation4], 1
    %14 = vsyncpa %s13, 0
    loop: start=0, step=1, limit=4
    $region2: #{conv4_encoder_forward.1} parent=1 // loop_pre_header
      _
    $region3: #{conv4_encoder_forward.1} parent=1 // loop_header
      %s16 = sphi 0, %s20
      %p17 = scmp.ge.s32.totalorder %s16, 4
      %s26 = sphi 0, %s28
      %s29 = sphi 0, %s26
      %s30 = sphi 0, %s29
      %s46 = sphi 0, %s30
      %s50 = sphi 0, %s50
      %s52 = sphi 0, %s50
      %s53 = sphi 0, %s52
      %s67 = sphi 0, %s53
      %s71 = sphi 0, %s71
      %s73 = sphi 0, %s71
      %s74 = sphi 0, %s73
      %s88 = sphi 0, %s74
      %s92 = sphi 0, %s92
      %s94 = sphi 0, %s92
      %s95 = sphi 0, %s94
      %s109 = sphi 0, %s95
      %s113 = sphi 0, %s113
      %s115 = sphi 0, %s113
      %s116 = sphi 0, %s115
      %s130 = sphi 0, %s116
      %s134 = sphi 0, %s134
      %s136 = sphi 0, %s134
      %s137 = sphi 0, %s136
      %s151 = sphi 0, %s137
      %s155 = sphi 0, %s155
      %s157 = sphi 0, %s155
      %s158 = sphi 0, %s157
      %s172 = sphi 0, %s158
      %s178 = sphi 0, %s180
      %s181 = sphi 0, %s178
      %s182 = sphi 0, %s181
      %s198 = sphi 0, %s182
    $region4: #{conv4_encoder_forward.1} parent=1 // loop_header_branch
      %19 = sbr.rel (%p17) target = $region8
    $region5: #{conv4_encoder_forward.1} parent=1 // loop_body
      %s21 = ssub.s32 %s16, 1
      %s22 = ssub.s32 %s16, 2
      %s23 = sadd.s32 %s16, 1
      %s24 = ssub.s32 %s16, %s23
      %p25 = scmp.eq.s32.totalorder %s24, 0
      %s27 = sadd.s32 %s26, 1
      %s28 = scalar_select %p25, %s26, %s27
      %p31 = pneg %p25
      %p32 = scmp.eq.s32.totalorder %s16, 1
      %p33 = por %p31, %p32
      %p34 = scmp.ne.s32.totalorder %s26, %s29
      %p35 = scmp.eq.s32.totalorder %s16, 0
      %p36 = por %p34, %p35
      %p37 = scmp.ne.s32.totalorder %s26, %s29
      %p38 = scmp.eq.s32.totalorder %s21, 1
      %p39 = por %p37, %p38
      %p40 = scmp.ne.s32.totalorder %s29, %s30
      %p41 = scmp.eq.s32.totalorder %s21, 0
      %p42 = por %p40, %p41
      %p43 = scmp.ne.s32.totalorder %s29, %s30
      %p44 = scmp.eq.s32.totalorder %s22, 1
      %p45 = por %p43, %p44
      %p47 = scmp.ne.s32.totalorder %s30, %s46
      %p48 = scmp.eq.s32.totalorder %s22, 0
      %p49 = por %p47, %p48
      %s51 = sadd.s32 %s50, 1
      %p54 = scmp.eq.s32.totalorder %s16, 1
      %p55 = scmp.ne.s32.totalorder %s50, %s52
      %p56 = scmp.eq.s32.totalorder %s16, 0
      %p57 = por %p55, %p56
      %p58 = scmp.ne.s32.totalorder %s50, %s52
      %p59 = scmp.eq.s32.totalorder %s21, 1
      %p60 = por %p58, %p59
      %p61 = scmp.ne.s32.totalorder %s52, %s53
      %p62 = scmp.eq.s32.totalorder %s21, 0
      %p63 = por %p61, %p62
      %p64 = scmp.ne.s32.totalorder %s52, %s53
      %p65 = scmp.eq.s32.totalorder %s22, 1
      %p66 = por %p64, %p65
      %p68 = scmp.ne.s32.totalorder %s53, %s67
      %p69 = scmp.eq.s32.totalorder %s22, 0
      %p70 = por %p68, %p69
      %s72 = sadd.s32 %s71, 1
      %p75 = scmp.eq.s32.totalorder %s16, 1
      %p76 = scmp.ne.s32.totalorder %s71, %s73
      %p77 = scmp.eq.s32.totalorder %s16, 0
      %p78 = por %p76, %p77
      %p79 = scmp.ne.s32.totalorder %s71, %s73
      %p80 = scmp.eq.s32.totalorder %s21, 1
      %p81 = por %p79, %p80
      %p82 = scmp.ne.s32.totalorder %s73, %s74
      %p83 = scmp.eq.s32.totalorder %s21, 0
      %p84 = por %p82, %p83
      %p85 = scmp.ne.s32.totalorder %s73, %s74
      %p86 = scmp.eq.s32.totalorder %s22, 1
      %p87 = por %p85, %p86
      %p89 = scmp.ne.s32.totalorder %s74, %s88
      %p90 = scmp.eq.s32.totalorder %s22, 0
      %p91 = por %p89, %p90
      %s93 = sadd.s32 %s92, 1
      %p96 = scmp.eq.s32.totalorder %s16, 1
      %p97 = scmp.ne.s32.totalorder %s92, %s94
      %p98 = scmp.eq.s32.totalorder %s16, 0
      %p99 = por %p97, %p98
      %p100 = scmp.ne.s32.totalorder %s92, %s94
      %p101 = scmp.eq.s32.totalorder %s21, 1
      %p102 = por %p100, %p101
      %p103 = scmp.ne.s32.totalorder %s94, %s95
      %p104 = scmp.eq.s32.totalorder %s21, 0
      %p105 = por %p103, %p104
      %p106 = scmp.ne.s32.totalorder %s94, %s95
      %p107 = scmp.eq.s32.totalorder %s22, 1
      %p108 = por %p106, %p107
      %p110 = scmp.ne.s32.totalorder %s95, %s109
      %p111 = scmp.eq.s32.totalorder %s22, 0
      %p112 = por %p110, %p111
      %s114 = sadd.s32 %s113, 1
      %p117 = scmp.eq.s32.totalorder %s16, 1
      %p118 = scmp.ne.s32.totalorder %s113, %s115
      %p119 = scmp.eq.s32.totalorder %s16, 0
      %p120 = por %p118, %p119
      %p121 = scmp.ne.s32.totalorder %s113, %s115
      %p122 = scmp.eq.s32.totalorder %s21, 1
      %p123 = por %p121, %p122
      %p124 = scmp.ne.s32.totalorder %s115, %s116
      %p125 = scmp.eq.s32.totalorder %s21, 0
      %p126 = por %p124, %p125
      %p127 = scmp.ne.s32.totalorder %s115, %s116
      %p128 = scmp.eq.s32.totalorder %s22, 1
      %p129 = por %p127, %p128
      %p131 = scmp.ne.s32.totalorder %s116, %s130
      %p132 = scmp.eq.s32.totalorder %s22, 0
      %p133 = por %p131, %p132
      %s135 = sadd.s32 %s134, 1
      %p138 = scmp.eq.s32.totalorder %s16, 1
      %p139 = scmp.ne.s32.totalorder %s134, %s136
      %p140 = scmp.eq.s32.totalorder %s16, 0
      %p141 = por %p139, %p140
      %p142 = scmp.ne.s32.totalorder %s134, %s136
      %p143 = scmp.eq.s32.totalorder %s21, 1
      %p144 = por %p142, %p143
      %p145 = scmp.ne.s32.totalorder %s136, %s137
      %p146 = scmp.eq.s32.totalorder %s21, 0
      %p147 = por %p145, %p146
      %p148 = scmp.ne.s32.totalorder %s136, %s137
      %p149 = scmp.eq.s32.totalorder %s22, 1
      %p150 = por %p148, %p149
      %p152 = scmp.ne.s32.totalorder %s137, %s151
      %p153 = scmp.eq.s32.totalorder %s22, 0
      %p154 = por %p152, %p153
      %s156 = sadd.s32 %s155, 1
      %p159 = scmp.eq.s32.totalorder %s16, 1
      %p160 = scmp.ne.s32.totalorder %s155, %s157
      %p161 = scmp.eq.s32.totalorder %s16, 0
      %p162 = por %p160, %p161
      %p163 = scmp.ne.s32.totalorder %s155, %s157
      %p164 = scmp.eq.s32.totalorder %s21, 1
      %p165 = por %p163, %p164
      %p166 = scmp.ne.s32.totalorder %s157, %s158
      %p167 = scmp.eq.s32.totalorder %s21, 0
      %p168 = por %p166, %p167
      %p169 = scmp.ne.s32.totalorder %s157, %s158
      %p170 = scmp.eq.s32.totalorder %s22, 1
      %p171 = por %p169, %p170
      %p173 = scmp.ne.s32.totalorder %s158, %s172
      %p174 = scmp.eq.s32.totalorder %s22, 0
      %p175 = por %p173, %p174
      %s176 = ssub.s32 %s16, %s23
      %p177 = scmp.eq.s32.totalorder %s176, 0
      %s179 = sadd.s32 %s178, 1
      %s180 = scalar_select %p177, %s178, %s179
      %p183 = pneg %p177
      %p184 = scmp.eq.s32.totalorder %s16, 1
      %p185 = por %p183, %p184
      %p186 = scmp.ne.s32.totalorder %s178, %s181
      %p187 = scmp.eq.s32.totalorder %s16, 0
      %p188 = por %p186, %p187
      %p189 = scmp.ne.s32.totalorder %s178, %s181
      %p190 = scmp.eq.s32.totalorder %s21, 1
      %p191 = por %p189, %p190
      %p192 = scmp.ne.s32.totalorder %s181, %s182
      %p193 = scmp.eq.s32.totalorder %s21, 0
      %p194 = por %p192, %p193
      %p195 = scmp.ne.s32.totalorder %s181, %s182
      %p196 = scmp.eq.s32.totalorder %s22, 1
      %p197 = por %p195, %p196
      %p199 = scmp.ne.s32.totalorder %s182, %s198
      %p200 = scmp.eq.s32.totalorder %s22, 0
      %p201 = por %p199, %p200
      %p202 = scmp.le.s32.totalorder 1, %s16
      %p203 = scmp.lt.s32.totalorder %s16, 3
      %p204 = pnand %p202, %p203
      %p205 = pneg %p204
      // Predicated region
      $region9: #{conv4_encoder_forward.1} parent=5 // pred_check
        _
      $region10: #{conv4_encoder_forward.1} parent=5 // pred_check_branch
        %207 = sbr.rel (%p204) target = $region12
      $region11: #{conv4_encoder_forward.1} parent=5 // pred_region
        %s208 = ssub.s32 %s16, 1
        // Predicated region
        $region13: #{conv4_encoder_forward.1} parent=11 // pred_check
          %p209 = pneg %p63
        $region14: #{conv4_encoder_forward.1} parent=11 // pred_check_branch
          %211 = sbr.rel (%p209) target = $region16
        $region15: #{conv4_encoder_forward.1} parent=11 // pred_region
          _
        $region16: #{conv4_encoder_forward.1} parent=11 // pred_fallthru
          _
        // Predicated region
        $region17: #{conv4_encoder_forward.1} parent=11 // pred_check
          %p212 = pneg %p84
        $region18: #{conv4_encoder_forward.1} parent=11 // pred_check_branch
          %214 = sbr.rel (%p212) target = $region20
        $region19: #{conv4_encoder_forward.1} parent=11 // pred_region
          _
        $region20: #{conv4_encoder_forward.1} parent=11 // pred_fallthru
          _
        // Predicated region
        $region21: #{conv4_encoder_forward.1} parent=11 // pred_check
          %p215 = pneg %p105
        $region22: #{conv4_encoder_forward.1} parent=11 // pred_check_branch
          %217 = sbr.rel (%p215) target = $region24
        $region23: #{conv4_encoder_forward.1} parent=11 // pred_region
          _
        $region24: #{conv4_encoder_forward.1} parent=11 // pred_fallthru
          _
        // Predicated region
        $region25: #{conv4_encoder_forward.1} parent=11 // pred_check
          %p218 = pneg %p126
        $region26: #{conv4_encoder_forward.1} parent=11 // pred_check_branch
          %220 = sbr.rel (%p218) target = $region28
        $region27: #{conv4_encoder_forward.1} parent=11 // pred_region
          _
        $region28: #{conv4_encoder_forward.1} parent=11 // pred_fallthru
          _
        // Predicated region
        $region29: #{conv4_encoder_forward.1} parent=11 // pred_check
          %p221 = pneg %p147
        $region30: #{conv4_encoder_forward.1} parent=11 // pred_check_branch
          %223 = sbr.rel (%p221) target = $region32
        $region31: #{conv4_encoder_forward.1} parent=11 // pred_region
          _
        $region32: #{conv4_encoder_forward.1} parent=11 // pred_fallthru
          _
        // Predicated region
        $region33: #{conv4_encoder_forward.1} parent=11 // pred_check
          %p224 = pneg %p168
        $region34: #{conv4_encoder_forward.1} parent=11 // pred_check_branch
          %226 = sbr.rel (%p224) target = $region36
        $region35: #{conv4_encoder_forward.1} parent=11 // pred_region
          _
        $region36: #{conv4_encoder_forward.1} parent=11 // pred_fallthru
          _
      $region12: #{conv4_encoder_forward.1} parent=5 // pred_fallthru
        _
      %p227 = scmp.lt.s32.totalorder %s16, 2
      // Predicated region
      $region37: #{conv4_encoder_forward.1} parent=5 // pred_check
        %p228 = pneg %p227
      $region38: #{conv4_encoder_forward.1} parent=5 // pred_check_branch
        %230 = sbr.rel (%p228) target = $region40
      $region39: #{conv4_encoder_forward.1} parent=5 // pred_region
        // Predicated region
        $region41: #{conv4_encoder_forward.1} parent=39 // pred_check
          %p231 = pneg %p36
        $region42: #{conv4_encoder_forward.1} parent=39 // pred_check_branch
          %233 = sbr.rel (%p231) target = $region44
        $region43: #{conv4_encoder_forward.1} parent=39 // pred_region
          %s234 = sand.u32 %s26, 1
          %s235 = sand.u32 %s26, 1
          %s236 = smul.addr %s235, 784
          %s237 = scalar_lea.vmem [#allocation2], %s236
          %s238 = smul.u32 2, %s16
          %s239 = smul.addr %s238, 8
          %s240 = scalar_lea.vmem %s0, %s239
          // Predicated region
          $region45: #{conv4_encoder_forward.1} parent=43 // pred_check
            _
          $region46: #{conv4_encoder_forward.1} parent=43 // pred_check_branch
            %242 = sbr.rel (0) target = $region48
          $region47: #{conv4_encoder_forward.1} parent=43 // pred_region
            // Predicated region
            $region49: #{conv4_encoder_forward.1} parent=47 // pred_check
              _
            $region50: #{conv4_encoder_forward.1} parent=47 // pred_check_branch
              %244 = sbr.rel (0) target = $region52
            $region51: #{conv4_encoder_forward.1} parent=47 // pred_region
              // Predicated region
              $region64: #{conv4_encoder_forward.1} parent=51 // pred_check
                _
              $region65: #{conv4_encoder_forward.1} parent=51 // pred_check_branch
                %454 = sbr.rel (0) target = $region67
              $region66: #{conv4_encoder_forward.1} parent=51 // pred_region
                loop: start=0, step=1, limit=1
                $region68: #{conv4_encoder_forward.1} parent=66 // loop_pre_header
                  _
                $region69: #{conv4_encoder_forward.1} parent=66 // loop_header
                  %s456 = sphi 0, %s460
                  %p457 = scmp.ge.s32.totalorder %s456, 1
                  %s461 = sphi %s240, %s240
                  %s462 = sphi %s237, %s237
                $region70: #{conv4_encoder_forward.1} parent=66 // loop_header_branch
                  %459 = sbr.rel (%p457) target = $region74
                $region71: #{conv4_encoder_forward.1} parent=66 // loop_body
                  %v463 = vld [vmem:[%s461] sm:$0xff]
                  %464 = vst [vmem:[%s462] sm:$0xff] %v463
                  %v465 = vld [vmem:[%s461 + $0x8] sm:$0xff]
                  %466 = vst [vmem:[%s462 + $0x8] sm:$0xff] %v465
                  %v467 = vld [vmem:[%s461 + $0x20] sm:$0xff]
                  %468 = vst [vmem:[%s462 + $0x10] sm:$0xff] %v467
                  %v469 = vld [vmem:[%s461 + $0x28] sm:$0xff]
                  %470 = vst [vmem:[%s462 + $0x18] sm:$0xff] %v469
                  %v471 = vld [vmem:[%s461 + $0x40] sm:$0xff]
                  %472 = vst [vmem:[%s462 + $0x20] sm:$0xff] %v471
                  %v473 = vld [vmem:[%s461 + $0x48] sm:$0xff]
                  %474 = vst [vmem:[%s462 + $0x28] sm:$0xff] %v473
                  %v475 = vld [vmem:[%s461 + $0x60] sm:$0xff]
                  %476 = vst [vmem:[%s462 + $0x30] sm:$0xff] %v475
                  %v477 = vld [vmem:[%s461 + $0x68] sm:$0xff]
                  %478 = vst [vmem:[%s462 + $0x38] sm:$0xff] %v477
                  %v479 = vld [vmem:[%s461 + $0x80] sm:$0xff]
                  %480 = vst [vmem:[%s462 + $0x40] sm:$0xff] %v479
                  %v481 = vld [vmem:[%s461 + $0x88] sm:$0xff]
                  %482 = vst [vmem:[%s462 + $0x48] sm:$0xff] %v481
                  %v483 = vld [vmem:[%s461 + $0xa0] sm:$0xff]
                  %484 = vst [vmem:[%s462 + $0x50] sm:$0xff] %v483
                  %v485 = vld [vmem:[%s461 + $0xa8] sm:$0xff]
                  %486 = vst [vmem:[%s462 + $0x58] sm:$0xff] %v485
                  %v487 = vld [vmem:[%s461 + $0xc0] sm:$0xff]
                  %488 = vst [vmem:[%s462 + $0x60] sm:$0xff] %v487
                  %v489 = vld [vmem:[%s461 + $0xc8] sm:$0xff]
                  %490 = vst [vmem:[%s462 + $0x68] sm:$0xff] %v489
                  %v491 = vld [vmem:[%s461 + $0xe0] sm:$0xff]
                  %492 = vst [vmem:[%s462 + $0x70] sm:$0xff] %v491
                  %v493 = vld [vmem:[%s461 + $0xe8] sm:$0xff]
                  %494 = vst [vmem:[%s462 + $0x78] sm:$0xff] %v493
                  %v495 = vld [vmem:[%s461 + $0x100] sm:$0xff]
                  %496 = vst [vmem:[%s462 + $0x80] sm:$0xff] %v495
                  %v497 = vld [vmem:[%s461 + $0x108] sm:$0xff]
                  %498 = vst [vmem:[%s462 + $0x88] sm:$0xff] %v497
                  %v499 = vld [vmem:[%s461 + $0x120] sm:$0xff]
                  %500 = vst [vmem:[%s462 + $0x90] sm:$0xff] %v499
                  %v501 = vld [vmem:[%s461 + $0x128] sm:$0xff]
                  %502 = vst [vmem:[%s462 + $0x98] sm:$0xff] %v501
                  %v503 = vld [vmem:[%s461 + $0x140] sm:$0xff]
                  %504 = vst [vmem:[%s462 + $0xa0] sm:$0xff] %v503
                  %v505 = vld [vmem:[%s461 + $0x148] sm:$0xff]
                  %506 = vst [vmem:[%s462 + $0xa8] sm:$0xff] %v505
                  %v507 = vld [vmem:[%s461 + $0x160] sm:$0xff]
                  %508 = vst [vmem:[%s462 + $0xb0] sm:$0xff] %v507
                  %v509 = vld [vmem:[%s461 + $0x168] sm:$0xff]
                  %510 = vst [vmem:[%s462 + $0xb8] sm:$0xff] %v509
                  %v511 = vld [vmem:[%s461 + $0x180] sm:$0xff]
                  %512 = vst [vmem:[%s462 + $0xc0] sm:$0xff] %v511
                  %v513 = vld [vmem:[%s461 + $0x188] sm:$0xff]
                  %514 = vst [vmem:[%s462 + $0xc8] sm:$0xff] %v513
                  %v515 = vld [vmem:[%s461 + $0x1a0] sm:$0xff]
                  %516 = vst [vmem:[%s462 + $0xd0] sm:$0xff] %v515
                  %v517 = vld [vmem:[%s461 + $0x1a8] sm:$0xff]
                  %518 = vst [vmem:[%s462 + $0xd8] sm:$0xff] %v517
                  %v519 = vld [vmem:[%s461 + $0x1c0] sm:$0xff]
                  %520 = vst [vmem:[%s462 + $0xe0] sm:$0xff] %v519
                  %v521 = vld [vmem:[%s461 + $0x1c8] sm:$0xff]
                  %522 = vst [vmem:[%s462 + $0xe8] sm:$0xff] %v521
                  %v523 = vld [vmem:[%s461 + $0x1e0] sm:$0xff]
                  %524 = vst [vmem:[%s462 + $0xf0] sm:$0xff] %v523
                  %v525 = vld [vmem:[%s461 + $0x1e8] sm:$0xff]
                  %526 = vst [vmem:[%s462 + $0xf8] sm:$0xff] %v525
                  %v527 = vld [vmem:[%s461 + $0x200] sm:$0xff]
                  %528 = vst [vmem:[%s462 + $0x100] sm:$0xff] %v527
                  %v529 = vld [vmem:[%s461 + $0x208] sm:$0xff]
                  %530 = vst [vmem:[%s462 + $0x108] sm:$0xff] %v529
                  %v531 = vld [vmem:[%s461 + $0x220] sm:$0xff]
                  %532 = vst [vmem:[%s462 + $0x110] sm:$0xff] %v531
                  %v533 = vld [vmem:[%s461 + $0x228] sm:$0xff]
                  %534 = vst [vmem:[%s462 + $0x118] sm:$0xff] %v533
                  %v535 = vld [vmem:[%s461 + $0x240] sm:$0xff]
                  %536 = vst [vmem:[%s462 + $0x120] sm:$0xff] %v535
                  %v537 = vld [vmem:[%s461 + $0x248] sm:$0xff]
                  %538 = vst [vmem:[%s462 + $0x128] sm:$0xff] %v537
                  %v539 = vld [vmem:[%s461 + $0x260] sm:$0xff]
                  %540 = vst [vmem:[%s462 + $0x130] sm:$0xff] %v539
                  %v541 = vld [vmem:[%s461 + $0x268] sm:$0xff]
                  %542 = vst [vmem:[%s462 + $0x138] sm:$0xff] %v541
                  %v543 = vld [vmem:[%s461 + $0x280] sm:$0xff]
                  %544 = vst [vmem:[%s462 + $0x140] sm:$0xff] %v543
                  %v545 = vld [vmem:[%s461 + $0x288] sm:$0xff]
                  %546 = vst [vmem:[%s462 + $0x148] sm:$0xff] %v545
                  %v547 = vld [vmem:[%s461 + $0x2a0] sm:$0xff]
                  %548 = vst [vmem:[%s462 + $0x150] sm:$0xff] %v547
                  %v549 = vld [vmem:[%s461 + $0x2a8] sm:$0xff]
                  %550 = vst [vmem:[%s462 + $0x158] sm:$0xff] %v549
                  %v551 = vld [vmem:[%s461 + $0x2c0] sm:$0xff]
                  %552 = vst [vmem:[%s462 + $0x160] sm:$0xff] %v551
                  %v553 = vld [vmem:[%s461 + $0x2c8] sm:$0xff]
                  %554 = vst [vmem:[%s462 + $0x168] sm:$0xff] %v553
                  %v555 = vld [vmem:[%s461 + $0x2e0] sm:$0xff]
                  %556 = vst [vmem:[%s462 + $0x170] sm:$0xff] %v555
                  %v557 = vld [vmem:[%s461 + $0x2e8] sm:$0xff]
                  %558 = vst [vmem:[%s462 + $0x178] sm:$0xff] %v557
                  %v559 = vld [vmem:[%s461 + $0x300] sm:$0xff]
                  %560 = vst [vmem:[%s462 + $0x180] sm:$0xff] %v559
                  %v561 = vld [vmem:[%s461 + $0x308] sm:$0xff]
                  %562 = vst [vmem:[%s462 + $0x188] sm:$0xff] %v561
                  %v563 = vld [vmem:[%s461 + $0x320] sm:$0xff]
                  %564 = vst [vmem:[%s462 + $0x190] sm:$0xff] %v563
                  %v565 = vld [vmem:[%s461 + $0x328] sm:$0xff]
                  %566 = vst [vmem:[%s462 + $0x198] sm:$0xff] %v565
                  %v567 = vld [vmem:[%s461 + $0x340] sm:$0xff]
                  %568 = vst [vmem:[%s462 + $0x1a0] sm:$0xff] %v567
                  %v569 = vld [vmem:[%s461 + $0x348] sm:$0xff]
                  %570 = vst [vmem:[%s462 + $0x1a8] sm:$0xff] %v569
                  %v571 = vld [vmem:[%s461 + $0x360] sm:$0xff]
                  %572 = vst [vmem:[%s462 + $0x1b0] sm:$0xff] %v571
                  %v573 = vld [vmem:[%s461 + $0x368] sm:$0xff]
                  %574 = vst [vmem:[%s462 + $0x1b8] sm:$0xff] %v573
                  %v575 = vld [vmem:[%s461 + $0x380] sm:$0xff]
                  %576 = vst [vmem:[%s462 + $0x1c0] sm:$0xff] %v575
                  %v577 = vld [vmem:[%s461 + $0x388] sm:$0xff]
                  %578 = vst [vmem:[%s462 + $0x1c8] sm:$0xff] %v577
                  %v579 = vld [vmem:[%s461 + $0x3a0] sm:$0xff]
                  %580 = vst [vmem:[%s462 + $0x1d0] sm:$0xff] %v579
                  %v581 = vld [vmem:[%s461 + $0x3a8] sm:$0xff]
                  %582 = vst [vmem:[%s462 + $0x1d8] sm:$0xff] %v581
                  %v583 = vld [vmem:[%s461 + $0x3c0] sm:$0xff]
                  %584 = vst [vmem:[%s462 + $0x1e0] sm:$0xff] %v583
                  %v585 = vld [vmem:[%s461 + $0x3c8] sm:$0xff]
                  %586 = vst [vmem:[%s462 + $0x1e8] sm:$0xff] %v585
                  %v587 = vld [vmem:[%s461 + $0x3e0] sm:$0xff]
                  %588 = vst [vmem:[%s462 + $0x1f0] sm:$0xff] %v587
                  %v589 = vld [vmem:[%s461 + $0x3e8] sm:$0xff]
                  %590 = vst [vmem:[%s462 + $0x1f8] sm:$0xff] %v589
                  %v591 = vld [vmem:[%s461 + $0x400] sm:$0xff]
                  %592 = vst [vmem:[%s462 + $0x200] sm:$0xff] %v591
                  %v593 = vld [vmem:[%s461 + $0x408] sm:$0xff]
                  %594 = vst [vmem:[%s462 + $0x208] sm:$0xff] %v593
                  %v595 = vld [vmem:[%s461 + $0x420] sm:$0xff]
                  %596 = vst [vmem:[%s462 + $0x210] sm:$0xff] %v595
                  %v597 = vld [vmem:[%s461 + $0x428] sm:$0xff]
                  %598 = vst [vmem:[%s462 + $0x218] sm:$0xff] %v597
                  %v599 = vld [vmem:[%s461 + $0x440] sm:$0xff]
                  %600 = vst [vmem:[%s462 + $0x220] sm:$0xff] %v599
                  %v601 = vld [vmem:[%s461 + $0x448] sm:$0xff]
                  %602 = vst [vmem:[%s462 + $0x228] sm:$0xff] %v601
                  %v603 = vld [vmem:[%s461 + $0x460] sm:$0xff]
                  %604 = vst [vmem:[%s462 + $0x230] sm:$0xff] %v603
                  %v605 = vld [vmem:[%s461 + $0x468] sm:$0xff]
                  %606 = vst [vmem:[%s462 + $0x238] sm:$0xff] %v605
                  %v607 = vld [vmem:[%s461 + $0x480] sm:$0xff]
                  %608 = vst [vmem:[%s462 + $0x240] sm:$0xff] %v607
                  %v609 = vld [vmem:[%s461 + $0x488] sm:$0xff]
                  %610 = vst [vmem:[%s462 + $0x248] sm:$0xff] %v609
                  %v611 = vld [vmem:[%s461 + $0x4a0] sm:$0xff]
                  %612 = vst [vmem:[%s462 + $0x250] sm:$0xff] %v611
                  %v613 = vld [vmem:[%s461 + $0x4a8] sm:$0xff]
                  %614 = vst [vmem:[%s462 + $0x258] sm:$0xff] %v613
                  %v615 = vld [vmem:[%s461 + $0x4c0] sm:$0xff]
                  %616 = vst [vmem:[%s462 + $0x260] sm:$0xff] %v615
                  %v617 = vld [vmem:[%s461 + $0x4c8] sm:$0xff]
                  %618 = vst [vmem:[%s462 + $0x268] sm:$0xff] %v617
                  %v619 = vld [vmem:[%s461 + $0x4e0] sm:$0xff]
                  %620 = vst [vmem:[%s462 + $0x270] sm:$0xff] %v619
                  %v621 = vld [vmem:[%s461 + $0x4e8] sm:$0xff]
                  %622 = vst [vmem:[%s462 + $0x278] sm:$0xff] %v621
                  %v623 = vld [vmem:[%s461 + $0x500] sm:$0xff]
                  %624 = vst [vmem:[%s462 + $0x280] sm:$0xff] %v623
                  %v625 = vld [vmem:[%s461 + $0x508] sm:$0xff]
                  %626 = vst [vmem:[%s462 + $0x288] sm:$0xff] %v625
                  %v627 = vld [vmem:[%s461 + $0x520] sm:$0xff]
                  %628 = vst [vmem:[%s462 + $0x290] sm:$0xff] %v627
                  %v629 = vld [vmem:[%s461 + $0x528] sm:$0xff]
                  %630 = vst [vmem:[%s462 + $0x298] sm:$0xff] %v629
                  %v631 = vld [vmem:[%s461 + $0x540] sm:$0xff]
                  %632 = vst [vmem:[%s462 + $0x2a0] sm:$0xff] %v631
                  %v633 = vld [vmem:[%s461 + $0x548] sm:$0xff]
                  %634 = vst [vmem:[%s462 + $0x2a8] sm:$0xff] %v633
                  %v635 = vld [vmem:[%s461 + $0x560] sm:$0xff]
                  %636 = vst [vmem:[%s462 + $0x2b0] sm:$0xff] %v635
                  %v637 = vld [vmem:[%s461 + $0x568] sm:$0xff]
                  %638 = vst [vmem:[%s462 + $0x2b8] sm:$0xff] %v637
                  %v639 = vld [vmem:[%s461 + $0x580] sm:$0xff]
                  %640 = vst [vmem:[%s462 + $0x2c0] sm:$0xff] %v639
                  %v641 = vld [vmem:[%s461 + $0x588] sm:$0xff]
                  %642 = vst [vmem:[%s462 + $0x2c8] sm:$0xff] %v641
                  %v643 = vld [vmem:[%s461 + $0x5a0] sm:$0xff]
                  %644 = vst [vmem:[%s462 + $0x2d0] sm:$0xff] %v643
                  %v645 = vld [vmem:[%s461 + $0x5a8] sm:$0xff]
                  %646 = vst [vmem:[%s462 + $0x2d8] sm:$0xff] %v645
                  %v647 = vld [vmem:[%s461 + $0x5c0] sm:$0xff]
                  %648 = vst [vmem:[%s462 + $0x2e0] sm:$0xff] %v647
                  %v649 = vld [vmem:[%s461 + $0x5c8] sm:$0xff]
                  %650 = vst [vmem:[%s462 + $0x2e8] sm:$0xff] %v649
                  %v651 = vld [vmem:[%s461 + $0x5e0] sm:$0xff]
                  %652 = vst [vmem:[%s462 + $0x2f0] sm:$0xff] %v651
                  %v653 = vld [vmem:[%s461 + $0x5e8] sm:$0xff]
                  %654 = vst [vmem:[%s462 + $0x2f8] sm:$0xff] %v653
                  %v655 = vld [vmem:[%s461 + $0x600] sm:$0xff]
                  %656 = vst [vmem:[%s462 + $0x300] sm:$0xff] %v655
                  %v657 = vld [vmem:[%s461 + $0x608] sm:$0xff]
                  %658 = vst [vmem:[%s462 + $0x308] sm:$0xff] %v657
                $region72: #{conv4_encoder_forward.1} parent=66 // loop_footer
                  %s460 = sadd.s32 1, %s456
                $region73: #{conv4_encoder_forward.1} parent=66 // loop_footer_branch
                  %455 = sbr.rel target = $region69
                $region74: #{conv4_encoder_forward.1} parent=66 // loop_exit
                  _
              $region67: #{conv4_encoder_forward.1} parent=51 // pred_fallthru
                _
              // Predicated region
              $region75: #{conv4_encoder_forward.1} parent=51 // pred_check
                _
              $region76: #{conv4_encoder_forward.1} parent=51 // pred_check_branch
                %660 = sbr.rel target = $region78
              $region77: #{conv4_encoder_forward.1} parent=51 // pred_region
                _
              $region78: #{conv4_encoder_forward.1} parent=51 // pred_fallthru
                _
            $region52: #{conv4_encoder_forward.1} parent=47 // pred_fallthru
              _
            // Predicated region
            $region53: #{conv4_encoder_forward.1} parent=47 // pred_check
              _
            $region54: #{conv4_encoder_forward.1} parent=47 // pred_check_branch
              %246 = sbr.rel target = $region56
            $region55: #{conv4_encoder_forward.1} parent=47 // pred_region
              %s248 = ssub.s32 256, 1
              loop: start=0, step=1, limit=1
              $region57: #{conv4_encoder_forward.1} parent=55 // loop_pre_header
                _
              $region58: #{conv4_encoder_forward.1} parent=55 // loop_header
                %s250 = sphi 0, %s254
                %p251 = scmp.ge.s32.totalorder %s250, 1
                %s255 = sphi %s240, %s240
                %s256 = sphi %s237, %s237
              $region59: #{conv4_encoder_forward.1} parent=55 // loop_header_branch
                %253 = sbr.rel (%p251) target = $region63
              $region60: #{conv4_encoder_forward.1} parent=55 // loop_body
                %v257 = vld [vmem:[%s255] sm:%s248]
                %258 = vst [vmem:[%s256] sm:%s248] %v257
                %v259 = vld [vmem:[%s255 + $0x8] sm:%s248]
                %260 = vst [vmem:[%s256 + $0x8] sm:%s248] %v259
                %v261 = vld [vmem:[%s255 + $0x20] sm:%s248]
                %262 = vst [vmem:[%s256 + $0x10] sm:%s248] %v261
                %v263 = vld [vmem:[%s255 + $0x28] sm:%s248]
                %264 = vst [vmem:[%s256 + $0x18] sm:%s248] %v263
                %v265 = vld [vmem:[%s255 + $0x40] sm:%s248]
                %266 = vst [vmem:[%s256 + $0x20] sm:%s248] %v265
                %v267 = vld [vmem:[%s255 + $0x48] sm:%s248]
                %268 = vst [vmem:[%s256 + $0x28] sm:%s248] %v267
                %v269 = vld [vmem:[%s255 + $0x60] sm:%s248]
                %270 = vst [vmem:[%s256 + $0x30] sm:%s248] %v269
                %v271 = vld [vmem:[%s255 + $0x68] sm:%s248]
                %272 = vst [vmem:[%s256 + $0x38] sm:%s248] %v271
                %v273 = vld [vmem:[%s255 + $0x80] sm:%s248]
                %274 = vst [vmem:[%s256 + $0x40] sm:%s248] %v273
                %v275 = vld [vmem:[%s255 + $0x88] sm:%s248]
                %276 = vst [vmem:[%s256 + $0x48] sm:%s248] %v275
                %v277 = vld [vmem:[%s255 + $0xa0] sm:%s248]
                %278 = vst [vmem:[%s256 + $0x50] sm:%s248] %v277
                %v279 = vld [vmem:[%s255 + $0xa8] sm:%s248]
                %280 = vst [vmem:[%s256 + $0x58] sm:%s248] %v279
                %v281 = vld [vmem:[%s255 + $0xc0] sm:%s248]
                %282 = vst [vmem:[%s256 + $0x60] sm:%s248] %v281
                %v283 = vld [vmem:[%s255 + $0xc8] sm:%s248]
                %284 = vst [vmem:[%s256 + $0x68] sm:%s248] %v283
                %v285 = vld [vmem:[%s255 + $0xe0] sm:%s248]
                %286 = vst [vmem:[%s256 + $0x70] sm:%s248] %v285
                %v287 = vld [vmem:[%s255 + $0xe8] sm:%s248]
                %288 = vst [vmem:[%s256 + $0x78] sm:%s248] %v287
                %v289 = vld [vmem:[%s255 + $0x100] sm:%s248]
                %290 = vst [vmem:[%s256 + $0x80] sm:%s248] %v289
                %v291 = vld [vmem:[%s255 + $0x108] sm:%s248]
                %292 = vst [vmem:[%s256 + $0x88] sm:%s248] %v291
                %v293 = vld [vmem:[%s255 + $0x120] sm:%s248]
                %294 = vst [vmem:[%s256 + $0x90] sm:%s248] %v293
                %v295 = vld [vmem:[%s255 + $0x128] sm:%s248]
                %296 = vst [vmem:[%s256 + $0x98] sm:%s248] %v295
                %v297 = vld [vmem:[%s255 + $0x140] sm:%s248]
                %298 = vst [vmem:[%s256 + $0xa0] sm:%s248] %v297
                %v299 = vld [vmem:[%s255 + $0x148] sm:%s248]
                %300 = vst [vmem:[%s256 + $0xa8] sm:%s248] %v299
                %v301 = vld [vmem:[%s255 + $0x160] sm:%s248]
                %302 = vst [vmem:[%s256 + $0xb0] sm:%s248] %v301
                %v303 = vld [vmem:[%s255 + $0x168] sm:%s248]
                %304 = vst [vmem:[%s256 + $0xb8] sm:%s248] %v303
                %v305 = vld [vmem:[%s255 + $0x180] sm:%s248]
                %306 = vst [vmem:[%s256 + $0xc0] sm:%s248] %v305
                %v307 = vld [vmem:[%s255 + $0x188] sm:%s248]
                %308 = vst [vmem:[%s256 + $0xc8] sm:%s248] %v307
                %v309 = vld [vmem:[%s255 + $0x1a0] sm:%s248]
                %310 = vst [vmem:[%s256 + $0xd0] sm:%s248] %v309
                %v311 = vld [vmem:[%s255 + $0x1a8] sm:%s248]
                %312 = vst [vmem:[%s256 + $0xd8] sm:%s248] %v311
                %v313 = vld [vmem:[%s255 + $0x1c0] sm:%s248]
                %314 = vst [vmem:[%s256 + $0xe0] sm:%s248] %v313
                %v315 = vld [vmem:[%s255 + $0x1c8] sm:%s248]
                %316 = vst [vmem:[%s256 + $0xe8] sm:%s248] %v315
                %v317 = vld [vmem:[%s255 + $0x1e0] sm:%s248]
                %318 = vst [vmem:[%s256 + $0xf0] sm:%s248] %v317
                %v319 = vld [vmem:[%s255 + $0x1e8] sm:%s248]
                %320 = vst [vmem:[%s256 + $0xf8] sm:%s248] %v319
                %v321 = vld [vmem:[%s255 + $0x200] sm:%s248]
                %322 = vst [vmem:[%s256 + $0x100] sm:%s248] %v321
                %v323 = vld [vmem:[%s255 + $0x208] sm:%s248]
                %324 = vst [vmem:[%s256 + $0x108] sm:%s248] %v323
                %v325 = vld [vmem:[%s255 + $0x220] sm:%s248]
                %326 = vst [vmem:[%s256 + $0x110] sm:%s248] %v325
                %v327 = vld [vmem:[%s255 + $0x228] sm:%s248]
                %328 = vst [vmem:[%s256 + $0x118] sm:%s248] %v327
                %v329 = vld [vmem:[%s255 + $0x240] sm:%s248]
                %330 = vst [vmem:[%s256 + $0x120] sm:%s248] %v329
                %v331 = vld [vmem:[%s255 + $0x248] sm:%s248]
                %332 = vst [vmem:[%s256 + $0x128] sm:%s248] %v331
                %v333 = vld [vmem:[%s255 + $0x260] sm:%s248]
                %334 = vst [vmem:[%s256 + $0x130] sm:%s248] %v333
                %v335 = vld [vmem:[%s255 + $0x268] sm:%s248]
                %336 = vst [vmem:[%s256 + $0x138] sm:%s248] %v335
                %v337 = vld [vmem:[%s255 + $0x280] sm:%s248]
                %338 = vst [vmem:[%s256 + $0x140] sm:%s248] %v337
                %v339 = vld [vmem:[%s255 + $0x288] sm:%s248]
                %340 = vst [vmem:[%s256 + $0x148] sm:%s248] %v339
                %v341 = vld [vmem:[%s255 + $0x2a0] sm:%s248]
                %342 = vst [vmem:[%s256 + $0x150] sm:%s248] %v341
                %v343 = vld [vmem:[%s255 + $0x2a8] sm:%s248]
                %344 = vst [vmem:[%s256 + $0x158] sm:%s248] %v343
                %v345 = vld [vmem:[%s255 + $0x2c0] sm:%s248]
                %346 = vst [vmem:[%s256 + $0x160] sm:%s248] %v345
                %v347 = vld [vmem:[%s255 + $0x2c8] sm:%s248]
                %348 = vst [vmem:[%s256 + $0x168] sm:%s248] %v347
                %v349 = vld [vmem:[%s255 + $0x2e0] sm:%s248]
                %350 = vst [vmem:[%s256 + $0x170] sm:%s248] %v349
                %v351 = vld [vmem:[%s255 + $0x2e8] sm:%s248]
                %352 = vst [vmem:[%s256 + $0x178] sm:%s248] %v351
                %v353 = vld [vmem:[%s255 + $0x300] sm:%s248]
                %354 = vst [vmem:[%s256 + $0x180] sm:%s248] %v353
                %v355 = vld [vmem:[%s255 + $0x308] sm:%s248]
                %356 = vst [vmem:[%s256 + $0x188] sm:%s248] %v355
                %v357 = vld [vmem:[%s255 + $0x320] sm:%s248]
                %358 = vst [vmem:[%s256 + $0x190] sm:%s248] %v357
                %v359 = vld [vmem:[%s255 + $0x328] sm:%s248]
                %360 = vst [vmem:[%s256 + $0x198] sm:%s248] %v359
                %v361 = vld [vmem:[%s255 + $0x340] sm:%s248]
                %362 = vst [vmem:[%s256 + $0x1a0] sm:%s248] %v361
                %v363 = vld [vmem:[%s255 + $0x348] sm:%s248]
                %364 = vst [vmem:[%s256 + $0x1a8] sm:%s248] %v363
                %v365 = vld [vmem:[%s255 + $0x360] sm:%s248]
                %366 = vst [vmem:[%s256 + $0x1b0] sm:%s248] %v365
                %v367 = vld [vmem:[%s255 + $0x368] sm:%s248]
                %368 = vst [vmem:[%s256 + $0x1b8] sm:%s248] %v367
                %v369 = vld [vmem:[%s255 + $0x380] sm:%s248]
                %370 = vst [vmem:[%s256 + $0x1c0] sm:%s248] %v369
                %v371 = vld [vmem:[%s255 + $0x388] sm:%s248]
                %372 = vst [vmem:[%s256 + $0x1c8] sm:%s248] %v371
                %v373 = vld [vmem:[%s255 + $0x3a0] sm:%s248]
                %374 = vst [vmem:[%s256 + $0x1d0] sm:%s248] %v373
                %v375 = vld [vmem:[%s255 + $0x3a8] sm:%s248]
                %376 = vst [vmem:[%s256 + $0x1d8] sm:%s248] %v375
                %v377 = vld [vmem:[%s255 + $0x3c0] sm:%s248]
                %378 = vst [vmem:[%s256 + $0x1e0] sm:%s248] %v377
                %v379 = vld [vmem:[%s255 + $0x3c8] sm:%s248]
                %380 = vst [vmem:[%s256 + $0x1e8] sm:%s248] %v379
                %v381 = vld [vmem:[%s255 + $0x3e0] sm:%s248]
                %382 = vst [vmem:[%s256 + $0x1f0] sm:%s248] %v381
                %v383 = vld [vmem:[%s255 + $0x3e8] sm:%s248]
                %384 = vst [vmem:[%s256 + $0x1f8] sm:%s248] %v383
                %v385 = vld [vmem:[%s255 + $0x400] sm:%s248]
                %386 = vst [vmem:[%s256 + $0x200] sm:%s248] %v385
                %v387 = vld [vmem:[%s255 + $0x408] sm:%s248]
                %388 = vst [vmem:[%s256 + $0x208] sm:%s248] %v387
                %v389 = vld [vmem:[%s255 + $0x420] sm:%s248]
                %390 = vst [vmem:[%s256 + $0x210] sm:%s248] %v389
                %v391 = vld [vmem:[%s255 + $0x428] sm:%s248]
                %392 = vst [vmem:[%s256 + $0x218] sm:%s248] %v391
                %v393 = vld [vmem:[%s255 + $0x440] sm:%s248]
                %394 = vst [vmem:[%s256 + $0x220] sm:%s248] %v393
                %v395 = vld [vmem:[%s255 + $0x448] sm:%s248]
                %396 = vst [vmem:[%s256 + $0x228] sm:%s248] %v395
                %v397 = vld [vmem:[%s255 + $0x460] sm:%s248]
                %398 = vst [vmem:[%s256 + $0x230] sm:%s248] %v397
                %v399 = vld [vmem:[%s255 + $0x468] sm:%s248]
                %400 = vst [vmem:[%s256 + $0x238] sm:%s248] %v399
                %v401 = vld [vmem:[%s255 + $0x480] sm:%s248]
                %402 = vst [vmem:[%s256 + $0x240] sm:%s248] %v401
                %v403 = vld [vmem:[%s255 + $0x488] sm:%s248]
                %404 = vst [vmem:[%s256 + $0x248] sm:%s248] %v403
                %v405 = vld [vmem:[%s255 + $0x4a0] sm:%s248]
                %406 = vst [vmem:[%s256 + $0x250] sm:%s248] %v405
                %v407 = vld [vmem:[%s255 + $0x4a8] sm:%s248]
                %408 = vst [vmem:[%s256 + $0x258] sm:%s248] %v407
                %v409 = vld [vmem:[%s255 + $0x4c0] sm:%s248]
                %410 = vst [vmem:[%s256 + $0x260] sm:%s248] %v409
                %v411 = vld [vmem:[%s255 + $0x4c8] sm:%s248]
                %412 = vst [vmem:[%s256 + $0x268] sm:%s248] %v411
                %v413 = vld [vmem:[%s255 + $0x4e0] sm:%s248]
                %414 = vst [vmem:[%s256 + $0x270] sm:%s248] %v413
                %v415 = vld [vmem:[%s255 + $0x4e8] sm:%s248]
                %416 = vst [vmem:[%s256 + $0x278] sm:%s248] %v415
                %v417 = vld [vmem:[%s255 + $0x500] sm:%s248]
                %418 = vst [vmem:[%s256 + $0x280] sm:%s248] %v417
                %v419 = vld [vmem:[%s255 + $0x508] sm:%s248]
                %420 = vst [vmem:[%s256 + $0x288] sm:%s248] %v419
                %v421 = vld [vmem:[%s255 + $0x520] sm:%s248]
                %422 = vst [vmem:[%s256 + $0x290] sm:%s248] %v421
                %v423 = vld [vmem:[%s255 + $0x528] sm:%s248]
                %424 = vst [vmem:[%s256 + $0x298] sm:%s248] %v423
                %v425 = vld [vmem:[%s255 + $0x540] sm:%s248]
                %426 = vst [vmem:[%s256 + $0x2a0] sm:%s248] %v425
                %v427 = vld [vmem:[%s255 + $0x548] sm:%s248]
                %428 = vst [vmem:[%s256 + $0x2a8] sm:%s248] %v427
                %v429 = vld [vmem:[%s255 + $0x560] sm:%s248]
                %430 = vst [vmem:[%s256 + $0x2b0] sm:%s248] %v429
                %v431 = vld [vmem:[%s255 + $0x568] sm:%s248]
                %432 = vst [vmem:[%s256 + $0x2b8] sm:%s248] %v431
                %v433 = vld [vmem:[%s255 + $0x580] sm:%s248]
                %434 = vst [vmem:[%s256 + $0x2c0] sm:%s248] %v433
                %v435 = vld [vmem:[%s255 + $0x588] sm:%s248]
                %436 = vst [vmem:[%s256 + $0x2c8] sm:%s248] %v435
                %v437 = vld [vmem:[%s255 + $0x5a0] sm:%s248]
                %438 = vst [vmem:[%s256 + $0x2d0] sm:%s248] %v437
                %v439 = vld [vmem:[%s255 + $0x5a8] sm:%s248]
                %440 = vst [vmem:[%s256 + $0x2d8] sm:%s248] %v439
                %v441 = vld [vmem:[%s255 + $0x5c0] sm:%s248]
                %442 = vst [vmem:[%s256 + $0x2e0] sm:%s248] %v441
                %v443 = vld [vmem:[%s255 + $0x5c8] sm:%s248]
                %444 = vst [vmem:[%s256 + $0x2e8] sm:%s248] %v443
                %v445 = vld [vmem:[%s255 + $0x5e0] sm:%s248]
                %446 = vst [vmem:[%s256 + $0x2f0] sm:%s248] %v445
                %v447 = vld [vmem:[%s255 + $0x5e8] sm:%s248]
                %448 = vst [vmem:[%s256 + $0x2f8] sm:%s248] %v447
                %v449 = vld [vmem:[%s255 + $0x600] sm:%s248]
                %450 = vst [vmem:[%s256 + $0x300] sm:%s248] %v449
                %v451 = vld [vmem:[%s255 + $0x608] sm:%s248]
                %452 = vst [vmem:[%s256 + $0x308] sm:%s248] %v451
              $region61: #{conv4_encoder_forward.1} parent=55 // loop_footer
                %s254 = sadd.s32 1, %s250
              $region62: #{conv4_encoder_forward.1} parent=55 // loop_footer_branch
                %249 = sbr.rel target = $region58
              $region63: #{conv4_encoder_forward.1} parent=55 // loop_exit
                _
            $region56: #{conv4_encoder_forward.1} parent=47 // pred_fallthru
              _
          $region48: #{conv4_encoder_forward.1} parent=43 // pred_fallthru
            _
          %661 = vnop
        $region44: #{conv4_encoder_forward.1} parent=39 // pred_fallthru
          _
      $region40: #{conv4_encoder_forward.1} parent=5 // pred_fallthru
        _
      %p662 = scmp.le.s32.totalorder 1, %s16
      %p663 = scmp.lt.s32.totalorder %s16, 3
      %p664 = pnand %p662, %p663
      %p665 = pneg %p664
      // Predicated region
      $region79: #{conv4_encoder_forward.1} parent=5 // pred_check
        _
      $region80: #{conv4_encoder_forward.1} parent=5 // pred_check_branch
        %667 = sbr.rel (%p664) target = $region82
      $region81: #{conv4_encoder_forward.1} parent=5 // pred_region
        %s668 = ssub.s32 %s16, 1
        %s669 = sand.u32 %s29, 1
        %s670 = sand.u32 %s29, 1
        %s671 = smul.addr %s670, 784
        %s672 = scalar_lea.vmem [#allocation2], %s671
        // Predicated region
        $region83: #{conv4_encoder_forward.1} parent=81 // pred_check
          %p673 = pneg %p42
        $region84: #{conv4_encoder_forward.1} parent=81 // pred_check_branch
          %675 = sbr.rel (%p673) target = $region86
        $region85: #{conv4_encoder_forward.1} parent=81 // pred_region
          _
        $region86: #{conv4_encoder_forward.1} parent=81 // pred_fallthru
          _
        %s676 = sand.u32 %s29, 1
        %s677 = sand.u32 %s29, 1
        %s678 = smul.addr %s677, 784
        %s679 = scalar_lea.vmem [#allocation2], %s678
        %p680 = pneg %p42
        %p681 = pneg %p39
        %p682 = pneg %p63
        %p683 = pneg %p60
        %p684 = pneg %p84
        %p685 = pneg %p81
        %p686 = pneg %p105
        %p687 = pneg %p102
        %p688 = pneg %p126
        %p689 = pneg %p123
        %p690 = pneg %p147
        %p691 = pneg %p144
        %p692 = pneg %p168
        %p693 = pneg %p165
        %p694 = pneg %p194
        %p695 = pneg %p191
        %s696 = sand.u32 %s181, 1
        %s697 = scalar_lea.sflag [#allocation4], %s696
        %s698 = sand.u32 %s181, 1
        %s699 = smul.addr %s698, 16
        %s700 = scalar_lea.vmem [#allocation3], %s699
        %s701 = smul.u32 2, %s21
        %s702 = smul.u32 2, %s21
        %v704 = vld [vmem:[%s672] sm:$0xff]
        %v705 = vld [vmem:[%s672 + $0x8] sm:$0xff]
        %v706 = vld [vmem:[%s672 + $0x10] sm:$0xff]
        %v707 = vld [vmem:[%s672 + $0x18] sm:$0xff]
        %v708 = vld [vmem:[%s672 + $0x20] sm:$0xff]
        %v709 = vld [vmem:[%s672 + $0x28] sm:$0xff]
        %v710 = vld [vmem:[%s672 + $0x30] sm:$0xff]
        %v711 = vld [vmem:[%s672 + $0x38] sm:$0xff]
        %v712 = vld [vmem:[%s672 + $0x40] sm:$0xff]
        %v713 = vld [vmem:[%s672 + $0x48] sm:$0xff]
        %v714 = vld [vmem:[%s672 + $0x50] sm:$0xff]
        %v715 = vld [vmem:[%s672 + $0x58] sm:$0xff]
        %v716 = vld [vmem:[%s672 + $0x60] sm:$0xff]
        %v717 = vld [vmem:[%s672 + $0x68] sm:$0xff]
        %v718 = vld [vmem:[%s672 + $0x70] sm:$0xff]
        %v719 = vld [vmem:[%s672 + $0x78] sm:$0xff]
        %v720 = vld [vmem:[%s672 + $0x80] sm:$0xff]
        %v721 = vld [vmem:[%s672 + $0x88] sm:$0xff]
        %v722 = vld [vmem:[%s672 + $0x90] sm:$0xff]
        %v723 = vld [vmem:[%s672 + $0x98] sm:$0xff]
        %v724 = vld [vmem:[%s672 + $0xa0] sm:$0xff]
        %v725 = vld [vmem:[%s672 + $0xa8] sm:$0xff]
        %v726 = vld [vmem:[%s672 + $0xb0] sm:$0xff]
        %v727 = vld [vmem:[%s672 + $0xb8] sm:$0xff]
        %v728 = vld [vmem:[%s672 + $0xc0] sm:$0xff]
        %v729 = vld [vmem:[%s672 + $0xc8] sm:$0xff]
        %v730 = vld [vmem:[%s672 + $0xd0] sm:$0xff]
        %v731 = vld [vmem:[%s672 + $0xd8] sm:$0xff]
        %v732 = vld [vmem:[%s672 + $0xe0] sm:$0xff]
        %v733 = vld [vmem:[%s672 + $0xe8] sm:$0xff]
        %v734 = vld [vmem:[%s672 + $0xf0] sm:$0xff]
        %v735 = vld [vmem:[%s672 + $0xf8] sm:$0xff]
        %v736 = vld [vmem:[%s672 + $0x100] sm:$0xff]
        %v737 = vld [vmem:[%s672 + $0x108] sm:$0xff]
        %v738 = vld [vmem:[%s672 + $0x110] sm:$0xff]
        %v739 = vld [vmem:[%s672 + $0x118] sm:$0xff]
        %v740 = vld [vmem:[%s672 + $0x120] sm:$0xff]
        %v741 = vld [vmem:[%s672 + $0x128] sm:$0xff]
        %v742 = vld [vmem:[%s672 + $0x130] sm:$0xff]
        %v743 = vld [vmem:[%s672 + $0x138] sm:$0xff]
        %v744 = vld [vmem:[%s672 + $0x140] sm:$0xff]
        %v745 = vld [vmem:[%s672 + $0x148] sm:$0xff]
        %v746 = vld [vmem:[%s672 + $0x150] sm:$0xff]
        %v747 = vld [vmem:[%s672 + $0x158] sm:$0xff]
        %v748 = vld [vmem:[%s672 + $0x160] sm:$0xff]
        %v749 = vld [vmem:[%s672 + $0x168] sm:$0xff]
        %v750 = vld [vmem:[%s672 + $0x170] sm:$0xff]
        %v751 = vld [vmem:[%s672 + $0x178] sm:$0xff]
        %v752 = vld [vmem:[%s672 + $0x180] sm:$0xff]
        %v753 = vld [vmem:[%s672 + $0x188] sm:$0xff]
        %v754 = vld [vmem:[%s672 + $0x190] sm:$0xff]
        %v755 = vld [vmem:[%s672 + $0x198] sm:$0xff]
        %v756 = vld [vmem:[%s672 + $0x1a0] sm:$0xff]
        %v757 = vld [vmem:[%s672 + $0x1a8] sm:$0xff]
        %v758 = vld [vmem:[%s672 + $0x1b0] sm:$0xff]
        %v759 = vld [vmem:[%s672 + $0x1b8] sm:$0xff]
        %v760 = vld [vmem:[%s672 + $0x1c0] sm:$0xff]
        %v761 = vld [vmem:[%s672 + $0x1c8] sm:$0xff]
        %v762 = vld [vmem:[%s672 + $0x1d0] sm:$0xff]
        %v763 = vld [vmem:[%s672 + $0x1d8] sm:$0xff]
        %v764 = vld [vmem:[%s672 + $0x1e0] sm:$0xff]
        %v765 = vld [vmem:[%s672 + $0x1e8] sm:$0xff]
        %v766 = vld [vmem:[%s672 + $0x1f0] sm:$0xff]
        %v767 = vld [vmem:[%s672 + $0x1f8] sm:$0xff]
        %v768 = vld [vmem:[%s672 + $0x200] sm:$0xff]
        %v769 = vld [vmem:[%s672 + $0x208] sm:$0xff]
        %v770 = vld [vmem:[%s672 + $0x210] sm:$0xff]
        %v771 = vld [vmem:[%s672 + $0x218] sm:$0xff]
        %v772 = vld [vmem:[%s672 + $0x220] sm:$0xff]
        %v773 = vld [vmem:[%s672 + $0x228] sm:$0xff]
        %v774 = vld [vmem:[%s672 + $0x230] sm:$0xff]
        %v775 = vld [vmem:[%s672 + $0x238] sm:$0xff]
        %v776 = vld [vmem:[%s672 + $0x240] sm:$0xff]
        %v777 = vld [vmem:[%s672 + $0x248] sm:$0xff]
        %v778 = vld [vmem:[%s672 + $0x250] sm:$0xff]
        %v779 = vld [vmem:[%s672 + $0x258] sm:$0xff]
        %v780 = vld [vmem:[%s672 + $0x260] sm:$0xff]
        %v781 = vld [vmem:[%s672 + $0x268] sm:$0xff]
        %v782 = vld [vmem:[%s672 + $0x270] sm:$0xff]
        %v783 = vld [vmem:[%s672 + $0x278] sm:$0xff]
        %v784 = vld [vmem:[%s672 + $0x280] sm:$0xff]
        %v785 = vld [vmem:[%s672 + $0x288] sm:$0xff]
        %v786 = vld [vmem:[%s672 + $0x290] sm:$0xff]
        %v787 = vld [vmem:[%s672 + $0x298] sm:$0xff]
        %v788 = vld [vmem:[%s672 + $0x2a0] sm:$0xff]
        %v789 = vld [vmem:[%s672 + $0x2a8] sm:$0xff]
        %v790 = vld [vmem:[%s672 + $0x2b0] sm:$0xff]
        %v791 = vld [vmem:[%s672 + $0x2b8] sm:$0xff]
        %v792 = vld [vmem:[%s672 + $0x2c0] sm:$0xff]
        %v793 = vld [vmem:[%s672 + $0x2c8] sm:$0xff]
        %v794 = vld [vmem:[%s672 + $0x2d0] sm:$0xff]
        %v795 = vld [vmem:[%s672 + $0x2d8] sm:$0xff]
        %v796 = vld [vmem:[%s672 + $0x2e0] sm:$0xff]
        %v797 = vld [vmem:[%s672 + $0x2e8] sm:$0xff]
        %v798 = vld [vmem:[%s672 + $0x2f0] sm:$0xff]
        %v799 = vld [vmem:[%s672 + $0x2f8] sm:$0xff]
        %v800 = vld [vmem:[%s672 + $0x300] sm:$0xff]
        %v801 = vld [vmem:[%s672 + $0x308] sm:$0xff]
        %v802 = vpack.c.bf16 %v705, %v704
        %v803 = vpack.c.bf16 %v707, %v706
        %v804 = vpack.c.bf16 %v709, %v708
        %v805 = vpack.c.bf16 %v711, %v710
        %v806 = vpack.c.bf16 %v713, %v712
        %v807 = vpack.c.bf16 %v715, %v714
        %v808 = vpack.c.bf16 %v717, %v716
        %v809 = vpack.c.bf16 %v719, %v718
        %v810 = vpack.c.bf16 %v721, %v720
        %v811 = vpack.c.bf16 %v723, %v722
        %v812 = vpack.c.bf16 %v725, %v724
        %v813 = vpack.c.bf16 %v727, %v726
        %v814 = vpack.c.bf16 %v729, %v728
        %v815 = vpack.c.bf16 %v731, %v730
        %v816 = vpack.c.bf16 %v733, %v732
        %v817 = vpack.c.bf16 %v735, %v734
        %v818 = vpack.c.bf16 %v737, %v736
        %v819 = vpack.c.bf16 %v739, %v738
        %v820 = vpack.c.bf16 %v741, %v740
        %v821 = vpack.c.bf16 %v743, %v742
        %v822 = vpack.c.bf16 %v745, %v744
        %v823 = vpack.c.bf16 %v747, %v746
        %v824 = vpack.c.bf16 %v749, %v748
        %v825 = vpack.c.bf16 %v751, %v750
        %v826 = vpack.c.bf16 %v753, %v752
        %v827 = vpack.c.bf16 %v755, %v754
        %v828 = vpack.c.bf16 %v757, %v756
        %v829 = vpack.c.bf16 %v759, %v758
        %v830 = vpack.c.bf16 %v761, %v760
        %v831 = vpack.c.bf16 %v763, %v762
        %v832 = vpack.c.bf16 %v765, %v764
        %v833 = vpack.c.bf16 %v767, %v766
        %v834 = vpack.c.bf16 %v769, %v768
        %v835 = vpack.c.bf16 %v771, %v770
        %v836 = vpack.c.bf16 %v773, %v772
        %v837 = vpack.c.bf16 %v775, %v774
        %v838 = vpack.c.bf16 %v777, %v776
        %v839 = vpack.c.bf16 %v779, %v778
        %v840 = vpack.c.bf16 %v781, %v780
        %v841 = vpack.c.bf16 %v783, %v782
        %v842 = vpack.c.bf16 %v785, %v784
        %v843 = vpack.c.bf16 %v787, %v786
        %v844 = vpack.c.bf16 %v789, %v788
        %v845 = vpack.c.bf16 %v791, %v790
        %v846 = vpack.c.bf16 %v793, %v792
        %v847 = vpack.c.bf16 %v795, %v794
        %v848 = vpack.c.bf16 %v797, %v796
        %v849 = vpack.c.bf16 %v799, %v798
        %v850 = vpack.c.bf16 %v801, %v800
        %v851 = vld [vmem:[%s1] sm:$0xf]
        %v852 = vld [vmem:[%s1 + $0x4] sm:$0xf]
        %v853 = vld [vmem:[%s1 + $0x8] sm:$0xf]
        %v854 = vld [vmem:[%s1 + $0xc] sm:$0xf]
        %v855 = vld [vmem:[%s1 + $0x10] sm:$0xf]
        %v856 = vld [vmem:[%s1 + $0x14] sm:$0xf]
        %v863 = vunpack.c.l.b16 %v851
        %v864 = vunpack.c.l.b16 %v852
        %v865 = vunpack.c.l.b16 %v853
        %v866 = vunpack.c.l.b16 %v854
        %v867 = vunpack.c.l.b16 %v855
        %v868 = vunpack.c.l.b16 %v856
        %v869 = vpack.c.b16 %v864, %v863
        %v870 = vpack.c.b16 %v866, %v865
        %v871 = vpack.c.b16 %v868, %v867
        %vm875 = vcmask 392192
        %v877 = vsel %vm875, %v802, 0
        %v880 = vsel %vm875, %v803, 0
        %v883 = vsel %vm875, %v804, 0
        %v886 = vsel %vm875, %v805, 0
        %v889 = vsel %vm875, %v806, 0
        %v892 = vsel %vm875, %v807, 0
        %v895 = vsel %vm875, %v808, 0
        %v898 = vsel %vm875, %v809, 0
        %v901 = vsel %vm875, %v810, 0
        %v904 = vsel %vm875, %v811, 0
        %v907 = vsel %vm875, %v812, 0
        %v910 = vsel %vm875, %v813, 0
        %v913 = vsel %vm875, %v814, 0
        %v916 = vsel %vm875, %v815, 0
        %v919 = vsel %vm875, %v816, 0
        %v922 = vsel %vm875, %v817, 0
        %v925 = vsel %vm875, %v818, 0
        %v928 = vsel %vm875, %v819, 0
        %v931 = vsel %vm875, %v820, 0
        %v934 = vsel %vm875, %v821, 0
        %v937 = vsel %vm875, %v822, 0
        %v940 = vsel %vm875, %v823, 0
        %v943 = vsel %vm875, %v824, 0
        %v946 = vsel %vm875, %v825, 0
        %v949 = vsel %vm875, %v826, 0
        %v952 = vsel %vm875, %v827, 0
        %v955 = vsel %vm875, %v828, 0
        %v958 = vsel %vm875, %v829, 0
        %v961 = vsel %vm875, %v830, 0
        %v964 = vsel %vm875, %v831, 0
        %v967 = vsel %vm875, %v832, 0
        %v970 = vsel %vm875, %v833, 0
        %v973 = vsel %vm875, %v834, 0
        %v976 = vsel %vm875, %v835, 0
        %v979 = vsel %vm875, %v836, 0
        %v982 = vsel %vm875, %v837, 0
        %v985 = vsel %vm875, %v838, 0
        %v988 = vsel %vm875, %v839, 0
        %v991 = vsel %vm875, %v840, 0
        %v994 = vsel %vm875, %v841, 0
        %v997 = vsel %vm875, %v842, 0
        %v1000 = vsel %vm875, %v843, 0
        %v1003 = vsel %vm875, %v844, 0
        %v1006 = vsel %vm875, %v845, 0
        %v1009 = vsel %vm875, %v846, 0
        %v1012 = vsel %vm875, %v847, 0
        %v1015 = vsel %vm875, %v848, 0
        %v1018 = vsel %vm875, %v849, 0
        %v1021 = vsel %vm875, %v850, 0
        %1023 = vmatprep.subr.bf16.mxu0 0
        %1024 = vmatpush1.bf16.msra.mxu0 0
        %1025 = vmatprep.subr.bf16.mxu0 0
        %1026 = vmatpush1.bf16.msra.mxu0 0
        %1027 = vmatprep.subr.bf16.mxu0 0
        %1028 = vmatpush1.bf16.msra.mxu0 0
        %1029 = vmatprep.subr.bf16.mxu0 0
        %1030 = vmatpush1.bf16.msra.mxu0 0
        %1031 = vmatprep.subr.bf16.mxu0 0
        %1032 = vmatpush1.bf16.msra.mxu0 0
        %1033 = vmatprep.subr.bf16.mxu0 0
        %1034 = vmatpush1.bf16.msra.mxu0 %v871
        %1035 = vmatprep.subr.bf16.mxu0 0
        %1036 = vmatpush1.bf16.msra.mxu0 %v870
        %1037 = vmatprep.subr.bf16.mxu0 0
        %1038 = vmatpush1.bf16.msra.mxu0 %v869
        %1039 = vmatprep.subr.bf16.mxu0 0
        %1040 = vmatpush2.bf16.msra.mxu0 0
        %1041 = vmatprep.subr.bf16.mxu0 0
        %1042 = vmatpush2.bf16.msra.mxu0 0
        %1043 = vmatprep.subr.bf16.mxu0 0
        %1044 = vmatpush2.bf16.msra.mxu0 0
        %1045 = vmatprep.subr.bf16.mxu0 0
        %1046 = vmatpush2.bf16.msra.mxu0 0
        %1047 = vmatprep.subr.bf16.mxu0 0
        %1048 = vmatpush2.bf16.msra.mxu0 0
        %1049 = vmatprep.subr.bf16.mxu0 0
        %1050 = vmatpush2.bf16.msra.mxu0 0
        %1051 = vmatprep.subr.bf16.mxu0 0
        %1052 = vmatpush2.bf16.msra.mxu0 0
        %1053 = vmatprep.subr.bf16.mxu0 0
        %1054 = vmatpush2.bf16.msra.mxu0 0
        %1055 = vmatprep.mubr.bf16.mxu0 0
        %1056 = vmatmul.mubr.bf16.gmra.mxu0 %v877
        %v1057 = vpop.f32.mrf.mxu0
        %v1058 = vadd.f32 0.0, %v1057
        %v1059 = vpop.f32.mrf.mxu0
        %v1060 = vpop.f32.mrf.mxu0
        %v1061 = vadd.f32 0.0, %v1060
        %v1062 = vpop.f32.mrf.mxu0
        %1063 = vmatprep.mubr.bf16.mxu0 0
        %1064 = vmatmul.mubr.bf16.gmra.mxu0 %v880
        %v1065 = vpop.f32.mrf.mxu0
        %v1066 = vadd.f32 0.0, %v1065
        %v1067 = vpop.f32.mrf.mxu0
        %v1068 = vpop.f32.mrf.mxu0
        %v1069 = vadd.f32 0.0, %v1068
        %v1070 = vpop.f32.mrf.mxu0
        %1071 = vmatprep.mubr.bf16.mxu0 0
        %1072 = vmatmul.mubr.bf16.gmra.mxu0 %v883
        %v1073 = vpop.f32.mrf.mxu0
        %v1074 = vadd.f32 0.0, %v1073
        %v1075 = vpop.f32.mrf.mxu0
        %v1076 = vpop.f32.mrf.mxu0
        %v1077 = vadd.f32 0.0, %v1076
        %v1078 = vpop.f32.mrf.mxu0
        %1079 = vmatprep.mubr.bf16.mxu0 0
        %1080 = vmatmul.mubr.bf16.gmra.mxu0 %v886
        %v1081 = vpop.f32.mrf.mxu0
        %v1082 = vadd.f32 0.0, %v1081
        %v1083 = vpop.f32.mrf.mxu0
        %v1084 = vpop.f32.mrf.mxu0
        %v1085 = vadd.f32 0.0, %v1084
        %v1086 = vpop.f32.mrf.mxu0
        %1087 = vmatprep.mubr.bf16.mxu0 0
        %1088 = vmatmul.mubr.bf16.gmra.mxu0 %v889
        %v1089 = vpop.f32.mrf.mxu0
        %v1090 = vadd.f32 0.0, %v1089
        %v1091 = vpop.f32.mrf.mxu0
        %v1092 = vpop.f32.mrf.mxu0
        %v1093 = vadd.f32 0.0, %v1092
        %v1094 = vpop.f32.mrf.mxu0
        %1095 = vmatprep.mubr.bf16.mxu0 0
        %1096 = vmatmul.mubr.bf16.gmra.mxu0 %v892
        %v1097 = vpop.f32.mrf.mxu0
        %v1098 = vadd.f32 0.0, %v1097
        %v1099 = vpop.f32.mrf.mxu0
        %v1100 = vpop.f32.mrf.mxu0
        %v1101 = vadd.f32 0.0, %v1100
        %v1102 = vpop.f32.mrf.mxu0
        %1103 = vmatprep.mubr.bf16.mxu0 0
        %1104 = vmatmul.mubr.bf16.gmra.mxu0 %v895
        %v1105 = vpop.f32.mrf.mxu0
        %v1106 = vadd.f32 0.0, %v1105
        %v1107 = vpop.f32.mrf.mxu0
        %v1108 = vpop.f32.mrf.mxu0
        %v1109 = vadd.f32 0.0, %v1108
        %v1110 = vpop.f32.mrf.mxu0
        %1111 = vmatprep.mubr.bf16.mxu0 0
        %1112 = vmatmul.mubr.bf16.gmra.mxu0 %v898
        %v1113 = vpop.f32.mrf.mxu0
        %v1114 = vadd.f32 0.0, %v1113
        %v1115 = vpop.f32.mrf.mxu0
        %v1116 = vpop.f32.mrf.mxu0
        %v1117 = vadd.f32 0.0, %v1116
        %v1118 = vpop.f32.mrf.mxu0
        %1119 = vmatprep.mubr.bf16.mxu0 0
        %1120 = vmatmul.mubr.bf16.gmra.mxu0 %v901
        %v1121 = vpop.f32.mrf.mxu0
        %v1122 = vadd.f32 0.0, %v1121
        %v1123 = vpop.f32.mrf.mxu0
        %v1124 = vpop.f32.mrf.mxu0
        %v1125 = vadd.f32 0.0, %v1124
        %v1126 = vpop.f32.mrf.mxu0
        %1127 = vmatprep.mubr.bf16.mxu0 0
        %1128 = vmatmul.mubr.bf16.gmra.mxu0 %v904
        %v1129 = vpop.f32.mrf.mxu0
        %v1130 = vadd.f32 0.0, %v1129
        %v1131 = vpop.f32.mrf.mxu0
        %v1132 = vpop.f32.mrf.mxu0
        %v1133 = vadd.f32 0.0, %v1132
        %v1134 = vpop.f32.mrf.mxu0
        %1135 = vmatprep.mubr.bf16.mxu0 0
        %1136 = vmatmul.mubr.bf16.gmra.mxu0 %v907
        %v1137 = vpop.f32.mrf.mxu0
        %v1138 = vadd.f32 0.0, %v1137
        %v1139 = vpop.f32.mrf.mxu0
        %v1140 = vpop.f32.mrf.mxu0
        %v1141 = vadd.f32 0.0, %v1140
        %v1142 = vpop.f32.mrf.mxu0
        %1143 = vmatprep.mubr.bf16.mxu0 0
        %1144 = vmatmul.mubr.bf16.gmra.mxu0 %v910
        %v1145 = vpop.f32.mrf.mxu0
        %v1146 = vadd.f32 0.0, %v1145
        %v1147 = vpop.f32.mrf.mxu0
        %v1148 = vpop.f32.mrf.mxu0
        %v1149 = vadd.f32 0.0, %v1148
        %v1150 = vpop.f32.mrf.mxu0
        %1151 = vmatprep.mubr.bf16.mxu0 0
        %1152 = vmatmul.mubr.bf16.gmra.mxu0 %v913
        %v1153 = vpop.f32.mrf.mxu0
        %v1154 = vadd.f32 0.0, %v1153
        %v1155 = vpop.f32.mrf.mxu0
        %v1156 = vpop.f32.mrf.mxu0
        %v1157 = vadd.f32 0.0, %v1156
        %v1158 = vpop.f32.mrf.mxu0
        %1159 = vmatprep.mubr.bf16.mxu0 0
        %1160 = vmatmul.mubr.bf16.gmra.mxu0 %v916
        %v1161 = vpop.f32.mrf.mxu0
        %v1162 = vadd.f32 0.0, %v1161
        %v1163 = vpop.f32.mrf.mxu0
        %v1164 = vpop.f32.mrf.mxu0
        %v1165 = vadd.f32 0.0, %v1164
        %v1166 = vpop.f32.mrf.mxu0
        %1167 = vmatprep.mubr.bf16.mxu0 0
        %1168 = vmatmul.mubr.bf16.gmra.mxu0 %v919
        %v1169 = vpop.f32.mrf.mxu0
        %v1170 = vadd.f32 0.0, %v1169
        %v1171 = vpop.f32.mrf.mxu0
        %v1172 = vpop.f32.mrf.mxu0
        %v1173 = vadd.f32 0.0, %v1172
        %v1174 = vpop.f32.mrf.mxu0
        %1175 = vmatprep.mubr.bf16.mxu0 0
        %1176 = vmatmul.mubr.bf16.gmra.mxu0 %v922
        %v1177 = vpop.f32.mrf.mxu0
        %v1178 = vadd.f32 0.0, %v1177
        %v1179 = vpop.f32.mrf.mxu0
        %v1180 = vpop.f32.mrf.mxu0
        %v1181 = vadd.f32 0.0, %v1180
        %v1182 = vpop.f32.mrf.mxu0
        %1183 = vmatprep.mubr.bf16.mxu0 0
        %1184 = vmatmul.mubr.bf16.gmra.mxu0 %v925
        %v1185 = vpop.f32.mrf.mxu0
        %v1186 = vadd.f32 0.0, %v1185
        %v1187 = vpop.f32.mrf.mxu0
        %v1188 = vpop.f32.mrf.mxu0
        %v1189 = vadd.f32 0.0, %v1188
        %v1190 = vpop.f32.mrf.mxu0
        %1191 = vmatprep.mubr.bf16.mxu0 0
        %1192 = vmatmul.mubr.bf16.gmra.mxu0 %v928
        %v1193 = vpop.f32.mrf.mxu0
        %v1194 = vadd.f32 0.0, %v1193
        %v1195 = vpop.f32.mrf.mxu0
        %v1196 = vpop.f32.mrf.mxu0
        %v1197 = vadd.f32 0.0, %v1196
        %v1198 = vpop.f32.mrf.mxu0
        %1199 = vmatprep.mubr.bf16.mxu0 0
        %1200 = vmatmul.mubr.bf16.gmra.mxu0 %v931
        %v1201 = vpop.f32.mrf.mxu0
        %v1202 = vadd.f32 0.0, %v1201
        %v1203 = vpop.f32.mrf.mxu0
        %v1204 = vpop.f32.mrf.mxu0
        %v1205 = vadd.f32 0.0, %v1204
        %v1206 = vpop.f32.mrf.mxu0
        %1207 = vmatprep.mubr.bf16.mxu0 0
        %1208 = vmatmul.mubr.bf16.gmra.mxu0 %v934
        %v1209 = vpop.f32.mrf.mxu0
        %v1210 = vadd.f32 0.0, %v1209
        %v1211 = vpop.f32.mrf.mxu0
        %v1212 = vpop.f32.mrf.mxu0
        %v1213 = vadd.f32 0.0, %v1212
        %v1214 = vpop.f32.mrf.mxu0
        %1215 = vmatprep.mubr.bf16.mxu0 0
        %1216 = vmatmul.mubr.bf16.gmra.mxu0 %v937
        %v1217 = vpop.f32.mrf.mxu0
        %v1218 = vadd.f32 0.0, %v1217
        %v1219 = vpop.f32.mrf.mxu0
        %v1220 = vpop.f32.mrf.mxu0
        %v1221 = vadd.f32 0.0, %v1220
        %v1222 = vpop.f32.mrf.mxu0
        %1223 = vmatprep.mubr.bf16.mxu0 0
        %1224 = vmatmul.mubr.bf16.gmra.mxu0 %v940
        %v1225 = vpop.f32.mrf.mxu0
        %v1226 = vadd.f32 0.0, %v1225
        %v1227 = vpop.f32.mrf.mxu0
        %v1228 = vpop.f32.mrf.mxu0
        %v1229 = vadd.f32 0.0, %v1228
        %v1230 = vpop.f32.mrf.mxu0
        %1231 = vmatprep.mubr.bf16.mxu0 0
        %1232 = vmatmul.mubr.bf16.gmra.mxu0 %v943
        %v1233 = vpop.f32.mrf.mxu0
        %v1234 = vadd.f32 0.0, %v1233
        %v1235 = vpop.f32.mrf.mxu0
        %v1236 = vpop.f32.mrf.mxu0
        %v1237 = vadd.f32 0.0, %v1236
        %v1238 = vpop.f32.mrf.mxu0
        %1239 = vmatprep.mubr.bf16.mxu0 0
        %1240 = vmatmul.mubr.bf16.gmra.mxu0 %v946
        %v1241 = vpop.f32.mrf.mxu0
        %v1242 = vadd.f32 0.0, %v1241
        %v1243 = vpop.f32.mrf.mxu0
        %v1244 = vpop.f32.mrf.mxu0
        %v1245 = vadd.f32 0.0, %v1244
        %v1246 = vpop.f32.mrf.mxu0
        %1247 = vmatprep.mubr.bf16.mxu0 0
        %1248 = vmatmul.mubr.bf16.gmra.mxu0 %v949
        %v1249 = vpop.f32.mrf.mxu0
        %v1250 = vadd.f32 0.0, %v1249
        %v1251 = vpop.f32.mrf.mxu0
        %v1252 = vpop.f32.mrf.mxu0
        %v1253 = vadd.f32 0.0, %v1252
        %v1254 = vpop.f32.mrf.mxu0
        %1255 = vmatprep.mubr.bf16.mxu0 0
        %1256 = vmatmul.mubr.bf16.gmra.mxu0 %v952
        %v1257 = vpop.f32.mrf.mxu0
        %v1258 = vadd.f32 0.0, %v1257
        %v1259 = vpop.f32.mrf.mxu0
        %v1260 = vpop.f32.mrf.mxu0
        %v1261 = vadd.f32 0.0, %v1260
        %v1262 = vpop.f32.mrf.mxu0
        %1263 = vmatprep.mubr.bf16.mxu0 0
        %1264 = vmatmul.mubr.bf16.gmra.mxu0 %v955
        %v1265 = vpop.f32.mrf.mxu0
        %v1266 = vadd.f32 0.0, %v1265
        %v1267 = vpop.f32.mrf.mxu0
        %v1268 = vpop.f32.mrf.mxu0
        %v1269 = vadd.f32 0.0, %v1268
        %v1270 = vpop.f32.mrf.mxu0
        %1271 = vmatprep.mubr.bf16.mxu0 0
        %1272 = vmatmul.mubr.bf16.gmra.mxu0 %v958
        %v1273 = vpop.f32.mrf.mxu0
        %v1274 = vadd.f32 0.0, %v1273
        %v1275 = vpop.f32.mrf.mxu0
        %v1276 = vpop.f32.mrf.mxu0
        %v1277 = vadd.f32 0.0, %v1276
        %v1278 = vpop.f32.mrf.mxu0
        %1279 = vmatprep.mubr.bf16.mxu0 0
        %1280 = vmatmul.mubr.bf16.gmra.mxu0 %v961
        %v1281 = vpop.f32.mrf.mxu0
        %v1282 = vadd.f32 0.0, %v1281
        %v1283 = vpop.f32.mrf.mxu0
        %v1284 = vpop.f32.mrf.mxu0
        %v1285 = vadd.f32 0.0, %v1284
        %v1286 = vpop.f32.mrf.mxu0
        %1287 = vmatprep.mubr.bf16.mxu0 0
        %1288 = vmatmul.mubr.bf16.gmra.mxu0 %v964
        %v1289 = vpop.f32.mrf.mxu0
        %v1290 = vadd.f32 0.0, %v1289
        %v1291 = vpop.f32.mrf.mxu0
        %v1292 = vpop.f32.mrf.mxu0
        %v1293 = vadd.f32 0.0, %v1292
        %v1294 = vpop.f32.mrf.mxu0
        %1295 = vmatprep.mubr.bf16.mxu0 0
        %1296 = vmatmul.mubr.bf16.gmra.mxu0 %v967
        %v1297 = vpop.f32.mrf.mxu0
        %v1298 = vadd.f32 0.0, %v1297
        %v1299 = vpop.f32.mrf.mxu0
        %v1300 = vpop.f32.mrf.mxu0
        %v1301 = vadd.f32 0.0, %v1300
        %v1302 = vpop.f32.mrf.mxu0
        %1303 = vmatprep.mubr.bf16.mxu0 0
        %1304 = vmatmul.mubr.bf16.gmra.mxu0 %v970
        %v1305 = vpop.f32.mrf.mxu0
        %v1306 = vadd.f32 0.0, %v1305
        %v1307 = vpop.f32.mrf.mxu0
        %v1308 = vpop.f32.mrf.mxu0
        %v1309 = vadd.f32 0.0, %v1308
        %v1310 = vpop.f32.mrf.mxu0
        %1311 = vmatprep.mubr.bf16.mxu0 0
        %1312 = vmatmul.mubr.bf16.gmra.mxu0 %v973
        %v1313 = vpop.f32.mrf.mxu0
        %v1314 = vadd.f32 0.0, %v1313
        %v1315 = vpop.f32.mrf.mxu0
        %v1316 = vpop.f32.mrf.mxu0
        %v1317 = vadd.f32 0.0, %v1316
        %v1318 = vpop.f32.mrf.mxu0
        %1319 = vmatprep.mubr.bf16.mxu0 0
        %1320 = vmatmul.mubr.bf16.gmra.mxu0 %v976
        %v1321 = vpop.f32.mrf.mxu0
        %v1322 = vadd.f32 0.0, %v1321
        %v1323 = vpop.f32.mrf.mxu0
        %v1324 = vpop.f32.mrf.mxu0
        %v1325 = vadd.f32 0.0, %v1324
        %v1326 = vpop.f32.mrf.mxu0
        %1327 = vmatprep.mubr.bf16.mxu0 0
        %1328 = vmatmul.mubr.bf16.gmra.mxu0 %v979
        %v1329 = vpop.f32.mrf.mxu0
        %v1330 = vadd.f32 0.0, %v1329
        %v1331 = vpop.f32.mrf.mxu0
        %v1332 = vpop.f32.mrf.mxu0
        %v1333 = vadd.f32 0.0, %v1332
        %v1334 = vpop.f32.mrf.mxu0
        %1335 = vmatprep.mubr.bf16.mxu0 0
        %1336 = vmatmul.mubr.bf16.gmra.mxu0 %v982
        %v1337 = vpop.f32.mrf.mxu0
        %v1338 = vadd.f32 0.0, %v1337
        %v1339 = vpop.f32.mrf.mxu0
        %v1340 = vpop.f32.mrf.mxu0
        %v1341 = vadd.f32 0.0, %v1340
        %v1342 = vpop.f32.mrf.mxu0
        %1343 = vmatprep.mubr.bf16.mxu0 0
        %1344 = vmatmul.mubr.bf16.gmra.mxu0 %v985
        %v1345 = vpop.f32.mrf.mxu0
        %v1346 = vadd.f32 0.0, %v1345
        %v1347 = vpop.f32.mrf.mxu0
        %v1348 = vpop.f32.mrf.mxu0
        %v1349 = vadd.f32 0.0, %v1348
        %v1350 = vpop.f32.mrf.mxu0
        %1351 = vmatprep.mubr.bf16.mxu0 0
        %1352 = vmatmul.mubr.bf16.gmra.mxu0 %v988
        %v1353 = vpop.f32.mrf.mxu0
        %v1354 = vadd.f32 0.0, %v1353
        %v1355 = vpop.f32.mrf.mxu0
        %v1356 = vpop.f32.mrf.mxu0
        %v1357 = vadd.f32 0.0, %v1356
        %v1358 = vpop.f32.mrf.mxu0
        %1359 = vmatprep.mubr.bf16.mxu0 0
        %1360 = vmatmul.mubr.bf16.gmra.mxu0 %v991
        %v1361 = vpop.f32.mrf.mxu0
        %v1362 = vadd.f32 0.0, %v1361
        %v1363 = vpop.f32.mrf.mxu0
        %v1364 = vpop.f32.mrf.mxu0
        %v1365 = vadd.f32 0.0, %v1364
        %v1366 = vpop.f32.mrf.mxu0
        %1367 = vmatprep.mubr.bf16.mxu0 0
        %1368 = vmatmul.mubr.bf16.gmra.mxu0 %v994
        %v1369 = vpop.f32.mrf.mxu0
        %v1370 = vadd.f32 0.0, %v1369
        %v1371 = vpop.f32.mrf.mxu0
        %v1372 = vpop.f32.mrf.mxu0
        %v1373 = vadd.f32 0.0, %v1372
        %v1374 = vpop.f32.mrf.mxu0
        %1375 = vmatprep.mubr.bf16.mxu0 0
        %1376 = vmatmul.mubr.bf16.gmra.mxu0 %v997
        %v1377 = vpop.f32.mrf.mxu0
        %v1378 = vadd.f32 0.0, %v1377
        %v1379 = vpop.f32.mrf.mxu0
        %v1380 = vpop.f32.mrf.mxu0
        %v1381 = vadd.f32 0.0, %v1380
        %v1382 = vpop.f32.mrf.mxu0
        %1383 = vmatprep.mubr.bf16.mxu0 0
        %1384 = vmatmul.mubr.bf16.gmra.mxu0 %v1000
        %v1385 = vpop.f32.mrf.mxu0
        %v1386 = vadd.f32 0.0, %v1385
        %v1387 = vpop.f32.mrf.mxu0
        %v1388 = vpop.f32.mrf.mxu0
        %v1389 = vadd.f32 0.0, %v1388
        %v1390 = vpop.f32.mrf.mxu0
        %1391 = vmatprep.mubr.bf16.mxu0 0
        %1392 = vmatmul.mubr.bf16.gmra.mxu0 %v1003
        %v1393 = vpop.f32.mrf.mxu0
        %v1394 = vadd.f32 0.0, %v1393
        %v1395 = vpop.f32.mrf.mxu0
        %v1396 = vpop.f32.mrf.mxu0
        %v1397 = vadd.f32 0.0, %v1396
        %v1398 = vpop.f32.mrf.mxu0
        %1399 = vmatprep.mubr.bf16.mxu0 0
        %1400 = vmatmul.mubr.bf16.gmra.mxu0 %v1006
        %v1401 = vpop.f32.mrf.mxu0
        %v1402 = vadd.f32 0.0, %v1401
        %v1403 = vpop.f32.mrf.mxu0
        %v1404 = vpop.f32.mrf.mxu0
        %v1405 = vadd.f32 0.0, %v1404
        %v1406 = vpop.f32.mrf.mxu0
        %1407 = vmatprep.mubr.bf16.mxu0 0
        %1408 = vmatmul.mubr.bf16.gmra.mxu0 %v1009
        %v1409 = vpop.f32.mrf.mxu0
        %v1410 = vadd.f32 0.0, %v1409
        %v1411 = vpop.f32.mrf.mxu0
        %v1412 = vpop.f32.mrf.mxu0
        %v1413 = vadd.f32 0.0, %v1412
        %v1414 = vpop.f32.mrf.mxu0
        %1415 = vmatprep.mubr.bf16.mxu0 0
        %1416 = vmatmul.mubr.bf16.gmra.mxu0 %v1012
        %v1417 = vpop.f32.mrf.mxu0
        %v1418 = vadd.f32 0.0, %v1417
        %v1419 = vpop.f32.mrf.mxu0
        %v1420 = vpop.f32.mrf.mxu0
        %v1421 = vadd.f32 0.0, %v1420
        %v1422 = vpop.f32.mrf.mxu0
        %1423 = vmatprep.mubr.bf16.mxu0 0
        %1424 = vmatmul.mubr.bf16.gmra.mxu0 %v1015
        %v1425 = vpop.f32.mrf.mxu0
        %v1426 = vadd.f32 0.0, %v1425
        %v1427 = vpop.f32.mrf.mxu0
        %v1428 = vpop.f32.mrf.mxu0
        %v1429 = vadd.f32 0.0, %v1428
        %v1430 = vpop.f32.mrf.mxu0
        %1431 = vmatprep.mubr.bf16.mxu0 0
        %1432 = vmatmul.mubr.bf16.gmra.mxu0 %v1018
        %v1433 = vpop.f32.mrf.mxu0
        %v1434 = vadd.f32 0.0, %v1433
        %v1435 = vpop.f32.mrf.mxu0
        %v1436 = vpop.f32.mrf.mxu0
        %v1437 = vadd.f32 0.0, %v1436
        %v1438 = vpop.f32.mrf.mxu0
        %1439 = vmatprep.mubr.bf16.mxu0 0
        %1440 = vmatmul.mubr.bf16.gmra.mxu0 %v1021
        %v1441 = vpop.f32.mrf.mxu0
        %v1442 = vadd.f32 0.0, %v1441
        %v1443 = vpop.f32.mrf.mxu0
        %v1444 = vpop.f32.mrf.mxu0
        %v1445 = vadd.f32 0.0, %v1444
        %v1446 = vpop.f32.mrf.mxu0
        %1447 = vdwg.mxu0
        %1520 = vrot.lane.b32.xlu0 %v1066, 112
        %v1521 = vpop.permute.xlu0 %1520
        %1522 = vrot.lane.b32.xlu0 %v1069, 112
        %v1523 = vpop.permute.xlu0 %1522
        %1524 = vrot.lane.b32.xlu0 %v1074, 112
        %v1525 = vpop.permute.xlu0 %1524
        %1526 = vrot.lane.b32.xlu0 %v1077, 112
        %v1527 = vpop.permute.xlu0 %1526
        %1528 = vrot.lane.b32.xlu0 %v1082, 112
        %v1529 = vpop.permute.xlu0 %1528
        %1530 = vrot.lane.b32.xlu0 %v1085, 112
        %v1531 = vpop.permute.xlu0 %1530
        %1532 = vrot.lane.b32.xlu0 %v1090, 112
        %v1533 = vpop.permute.xlu0 %1532
        %1534 = vrot.lane.b32.xlu0 %v1093, 112
        %v1535 = vpop.permute.xlu0 %1534
        %1536 = vrot.lane.b32.xlu0 %v1098, 112
        %v1537 = vpop.permute.xlu0 %1536
        %1538 = vrot.lane.b32.xlu0 %v1101, 112
        %v1539 = vpop.permute.xlu0 %1538
        %1540 = vrot.lane.b32.xlu0 %v1106, 112
        %v1541 = vpop.permute.xlu0 %1540
        %1542 = vrot.lane.b32.xlu0 %v1109, 112
        %v1543 = vpop.permute.xlu0 %1542
        %1544 = vrot.lane.b32.xlu0 %v1122, 112
        %v1545 = vpop.permute.xlu0 %1544
        %1546 = vrot.lane.b32.xlu0 %v1125, 112
        %v1547 = vpop.permute.xlu0 %1546
        %1548 = vrot.lane.b32.xlu0 %v1130, 112
        %v1549 = vpop.permute.xlu0 %1548
        %1550 = vrot.lane.b32.xlu0 %v1133, 112
        %v1551 = vpop.permute.xlu0 %1550
        %1552 = vrot.lane.b32.xlu0 %v1138, 112
        %v1553 = vpop.permute.xlu0 %1552
        %1554 = vrot.lane.b32.xlu0 %v1141, 112
        %v1555 = vpop.permute.xlu0 %1554
        %1556 = vrot.lane.b32.xlu0 %v1146, 112
        %v1557 = vpop.permute.xlu0 %1556
        %1558 = vrot.lane.b32.xlu0 %v1149, 112
        %v1559 = vpop.permute.xlu0 %1558
        %1560 = vrot.lane.b32.xlu0 %v1154, 112
        %v1561 = vpop.permute.xlu0 %1560
        %1562 = vrot.lane.b32.xlu0 %v1157, 112
        %v1563 = vpop.permute.xlu0 %1562
        %1564 = vrot.lane.b32.xlu0 %v1162, 112
        %v1565 = vpop.permute.xlu0 %1564
        %1566 = vrot.lane.b32.xlu0 %v1165, 112
        %v1567 = vpop.permute.xlu0 %1566
        %1568 = vrot.lane.b32.xlu0 %v1178, 112
        %v1569 = vpop.permute.xlu0 %1568
        %1570 = vrot.lane.b32.xlu0 %v1181, 112
        %v1571 = vpop.permute.xlu0 %1570
        %1572 = vrot.lane.b32.xlu0 %v1186, 112
        %v1573 = vpop.permute.xlu0 %1572
        %1574 = vrot.lane.b32.xlu0 %v1189, 112
        %v1575 = vpop.permute.xlu0 %1574
        %1576 = vrot.lane.b32.xlu0 %v1194, 112
        %v1577 = vpop.permute.xlu0 %1576
        %1578 = vrot.lane.b32.xlu0 %v1197, 112
        %v1579 = vpop.permute.xlu0 %1578
        %1580 = vrot.lane.b32.xlu0 %v1202, 112
        %v1581 = vpop.permute.xlu0 %1580
        %1582 = vrot.lane.b32.xlu0 %v1205, 112
        %v1583 = vpop.permute.xlu0 %1582
        %1584 = vrot.lane.b32.xlu0 %v1210, 112
        %v1585 = vpop.permute.xlu0 %1584
        %1586 = vrot.lane.b32.xlu0 %v1213, 112
        %v1587 = vpop.permute.xlu0 %1586
        %1588 = vrot.lane.b32.xlu0 %v1218, 112
        %v1589 = vpop.permute.xlu0 %1588
        %1590 = vrot.lane.b32.xlu0 %v1221, 112
        %v1591 = vpop.permute.xlu0 %1590
        %1592 = vrot.lane.b32.xlu0 %v1234, 112
        %v1593 = vpop.permute.xlu0 %1592
        %1594 = vrot.lane.b32.xlu0 %v1237, 112
        %v1595 = vpop.permute.xlu0 %1594
        %1596 = vrot.lane.b32.xlu0 %v1242, 112
        %v1597 = vpop.permute.xlu0 %1596
        %1598 = vrot.lane.b32.xlu0 %v1245, 112
        %v1599 = vpop.permute.xlu0 %1598
        %1600 = vrot.lane.b32.xlu0 %v1250, 112
        %v1601 = vpop.permute.xlu0 %1600
        %1602 = vrot.lane.b32.xlu0 %v1253, 112
        %v1603 = vpop.permute.xlu0 %1602
        %1604 = vrot.lane.b32.xlu0 %v1258, 112
        %v1605 = vpop.permute.xlu0 %1604
        %1606 = vrot.lane.b32.xlu0 %v1261, 112
        %v1607 = vpop.permute.xlu0 %1606
        %1608 = vrot.lane.b32.xlu0 %v1266, 112
        %v1609 = vpop.permute.xlu0 %1608
        %1610 = vrot.lane.b32.xlu0 %v1269, 112
        %v1611 = vpop.permute.xlu0 %1610
        %1612 = vrot.lane.b32.xlu0 %v1274, 112
        %v1613 = vpop.permute.xlu0 %1612
        %1614 = vrot.lane.b32.xlu0 %v1277, 112
        %v1615 = vpop.permute.xlu0 %1614
        %1616 = vrot.lane.b32.xlu0 %v1290, 112
        %v1617 = vpop.permute.xlu0 %1616
        %1618 = vrot.lane.b32.xlu0 %v1293, 112
        %v1619 = vpop.permute.xlu0 %1618
        %1620 = vrot.lane.b32.xlu0 %v1298, 112
        %v1621 = vpop.permute.xlu0 %1620
        %1622 = vrot.lane.b32.xlu0 %v1301, 112
        %v1623 = vpop.permute.xlu0 %1622
        %1624 = vrot.lane.b32.xlu0 %v1306, 112
        %v1625 = vpop.permute.xlu0 %1624
        %1626 = vrot.lane.b32.xlu0 %v1309, 112
        %v1627 = vpop.permute.xlu0 %1626
        %1628 = vrot.lane.b32.xlu0 %v1314, 112
        %v1629 = vpop.permute.xlu0 %1628
        %1630 = vrot.lane.b32.xlu0 %v1317, 112
        %v1631 = vpop.permute.xlu0 %1630
        %1632 = vrot.lane.b32.xlu0 %v1322, 112
        %v1633 = vpop.permute.xlu0 %1632
        %1634 = vrot.lane.b32.xlu0 %v1325, 112
        %v1635 = vpop.permute.xlu0 %1634
        %1636 = vrot.lane.b32.xlu0 %v1330, 112
        %v1637 = vpop.permute.xlu0 %1636
        %1638 = vrot.lane.b32.xlu0 %v1333, 112
        %v1639 = vpop.permute.xlu0 %1638
        %1640 = vrot.lane.b32.xlu0 %v1346, 112
        %v1641 = vpop.permute.xlu0 %1640
        %1642 = vrot.lane.b32.xlu0 %v1349, 112
        %v1643 = vpop.permute.xlu0 %1642
        %1644 = vrot.lane.b32.xlu0 %v1354, 112
        %v1645 = vpop.permute.xlu0 %1644
        %1646 = vrot.lane.b32.xlu0 %v1357, 112
        %v1647 = vpop.permute.xlu0 %1646
        %1648 = vrot.lane.b32.xlu0 %v1362, 112
        %v1649 = vpop.permute.xlu0 %1648
        %1650 = vrot.lane.b32.xlu0 %v1365, 112
        %v1651 = vpop.permute.xlu0 %1650
        %1652 = vrot.lane.b32.xlu0 %v1370, 112
        %v1653 = vpop.permute.xlu0 %1652
        %1654 = vrot.lane.b32.xlu0 %v1373, 112
        %v1655 = vpop.permute.xlu0 %1654
        %1656 = vrot.lane.b32.xlu0 %v1378, 112
        %v1657 = vpop.permute.xlu0 %1656
        %1658 = vrot.lane.b32.xlu0 %v1381, 112
        %v1659 = vpop.permute.xlu0 %1658
        %1660 = vrot.lane.b32.xlu0 %v1386, 112
        %v1661 = vpop.permute.xlu0 %1660
        %1662 = vrot.lane.b32.xlu0 %v1389, 112
        %v1663 = vpop.permute.xlu0 %1662
        %v1736 = vadd.f32 %v1058, %v1521
        %v1737 = vadd.f32 %v1061, %v1523
        %v1738 = vadd.f32 %v1066, %v1525
        %v1739 = vadd.f32 %v1069, %v1527
        %v1740 = vadd.f32 %v1074, %v1529
        %v1741 = vadd.f32 %v1077, %v1531
        %v1742 = vadd.f32 %v1082, %v1533
        %v1743 = vadd.f32 %v1085, %v1535
        %v1744 = vadd.f32 %v1090, %v1537
        %v1745 = vadd.f32 %v1093, %v1539
        %v1746 = vadd.f32 %v1098, %v1541
        %v1747 = vadd.f32 %v1101, %v1543
        %v1748 = vadd.f32 %v1114, %v1545
        %v1749 = vadd.f32 %v1117, %v1547
        %v1750 = vadd.f32 %v1122, %v1549
        %v1751 = vadd.f32 %v1125, %v1551
        %v1752 = vadd.f32 %v1130, %v1553
        %v1753 = vadd.f32 %v1133, %v1555
        %v1754 = vadd.f32 %v1138, %v1557
        %v1755 = vadd.f32 %v1141, %v1559
        %v1756 = vadd.f32 %v1146, %v1561
        %v1757 = vadd.f32 %v1149, %v1563
        %v1758 = vadd.f32 %v1154, %v1565
        %v1759 = vadd.f32 %v1157, %v1567
        %v1760 = vadd.f32 %v1170, %v1569
        %v1761 = vadd.f32 %v1173, %v1571
        %v1762 = vadd.f32 %v1178, %v1573
        %v1763 = vadd.f32 %v1181, %v1575
        %v1764 = vadd.f32 %v1186, %v1577
        %v1765 = vadd.f32 %v1189, %v1579
        %v1766 = vadd.f32 %v1194, %v1581
        %v1767 = vadd.f32 %v1197, %v1583
        %v1768 = vadd.f32 %v1202, %v1585
        %v1769 = vadd.f32 %v1205, %v1587
        %v1770 = vadd.f32 %v1210, %v1589
        %v1771 = vadd.f32 %v1213, %v1591
        %v1772 = vadd.f32 %v1226, %v1593
        %v1773 = vadd.f32 %v1229, %v1595
        %v1774 = vadd.f32 %v1234, %v1597
        %v1775 = vadd.f32 %v1237, %v1599
        %v1776 = vadd.f32 %v1242, %v1601
        %v1777 = vadd.f32 %v1245, %v1603
        %v1778 = vadd.f32 %v1250, %v1605
        %v1779 = vadd.f32 %v1253, %v1607
        %v1780 = vadd.f32 %v1258, %v1609
        %v1781 = vadd.f32 %v1261, %v1611
        %v1782 = vadd.f32 %v1266, %v1613
        %v1783 = vadd.f32 %v1269, %v1615
        %v1784 = vadd.f32 %v1282, %v1617
        %v1785 = vadd.f32 %v1285, %v1619
        %v1786 = vadd.f32 %v1290, %v1621
        %v1787 = vadd.f32 %v1293, %v1623
        %v1788 = vadd.f32 %v1298, %v1625
        %v1789 = vadd.f32 %v1301, %v1627
        %v1790 = vadd.f32 %v1306, %v1629
        %v1791 = vadd.f32 %v1309, %v1631
        %v1792 = vadd.f32 %v1314, %v1633
        %v1793 = vadd.f32 %v1317, %v1635
        %v1794 = vadd.f32 %v1322, %v1637
        %v1795 = vadd.f32 %v1325, %v1639
        %v1796 = vadd.f32 %v1338, %v1641
        %v1797 = vadd.f32 %v1341, %v1643
        %v1798 = vadd.f32 %v1346, %v1645
        %v1799 = vadd.f32 %v1349, %v1647
        %v1800 = vadd.f32 %v1354, %v1649
        %v1801 = vadd.f32 %v1357, %v1651
        %v1802 = vadd.f32 %v1362, %v1653
        %v1803 = vadd.f32 %v1365, %v1655
        %v1804 = vadd.f32 %v1370, %v1657
        %v1805 = vadd.f32 %v1373, %v1659
        %v1806 = vadd.f32 %v1378, %v1661
        %v1807 = vadd.f32 %v1381, %v1663
        %1830 = vrot.lane.b32.xlu0 %v1114, 96
        %v1831 = vpop.permute.xlu0 %1830
        %1832 = vrot.lane.b32.xlu0 %v1117, 96
        %v1833 = vpop.permute.xlu0 %1832
        %1834 = vrot.lane.b32.xlu0 %v1122, 96
        %v1835 = vpop.permute.xlu0 %1834
        %1836 = vrot.lane.b32.xlu0 %v1125, 96
        %v1837 = vpop.permute.xlu0 %1836
        %1838 = vrot.lane.b32.xlu0 %v1130, 96
        %v1839 = vpop.permute.xlu0 %1838
        %1840 = vrot.lane.b32.xlu0 %v1133, 96
        %v1841 = vpop.permute.xlu0 %1840
        %1842 = vrot.lane.b32.xlu0 %v1138, 96
        %v1843 = vpop.permute.xlu0 %1842
        %1844 = vrot.lane.b32.xlu0 %v1141, 96
        %v1845 = vpop.permute.xlu0 %1844
        %1846 = vrot.lane.b32.xlu0 %v1146, 96
        %v1847 = vpop.permute.xlu0 %1846
        %1848 = vrot.lane.b32.xlu0 %v1149, 96
        %v1849 = vpop.permute.xlu0 %1848
        %1850 = vrot.lane.b32.xlu0 %v1154, 96
        %v1851 = vpop.permute.xlu0 %1850
        %1852 = vrot.lane.b32.xlu0 %v1157, 96
        %v1853 = vpop.permute.xlu0 %1852
        %1854 = vrot.lane.b32.xlu0 %v1170, 96
        %v1855 = vpop.permute.xlu0 %1854
        %1856 = vrot.lane.b32.xlu0 %v1173, 96
        %v1857 = vpop.permute.xlu0 %1856
        %1858 = vrot.lane.b32.xlu0 %v1178, 96
        %v1859 = vpop.permute.xlu0 %1858
        %1860 = vrot.lane.b32.xlu0 %v1181, 96
        %v1861 = vpop.permute.xlu0 %1860
        %1862 = vrot.lane.b32.xlu0 %v1186, 96
        %v1863 = vpop.permute.xlu0 %1862
        %1864 = vrot.lane.b32.xlu0 %v1189, 96
        %v1865 = vpop.permute.xlu0 %1864
        %1866 = vrot.lane.b32.xlu0 %v1194, 96
        %v1867 = vpop.permute.xlu0 %1866
        %1868 = vrot.lane.b32.xlu0 %v1197, 96
        %v1869 = vpop.permute.xlu0 %1868
        %1870 = vrot.lane.b32.xlu0 %v1202, 96
        %v1871 = vpop.permute.xlu0 %1870
        %1872 = vrot.lane.b32.xlu0 %v1205, 96
        %v1873 = vpop.permute.xlu0 %1872
        %1874 = vrot.lane.b32.xlu0 %v1210, 96
        %v1875 = vpop.permute.xlu0 %1874
        %1876 = vrot.lane.b32.xlu0 %v1213, 96
        %v1877 = vpop.permute.xlu0 %1876
        %1878 = vrot.lane.b32.xlu0 %v1226, 96
        %v1879 = vpop.permute.xlu0 %1878
        %1880 = vrot.lane.b32.xlu0 %v1229, 96
        %v1881 = vpop.permute.xlu0 %1880
        %1882 = vrot.lane.b32.xlu0 %v1234, 96
        %v1883 = vpop.permute.xlu0 %1882
        %1884 = vrot.lane.b32.xlu0 %v1237, 96
        %v1885 = vpop.permute.xlu0 %1884
        %1886 = vrot.lane.b32.xlu0 %v1242, 96
        %v1887 = vpop.permute.xlu0 %1886
        %1888 = vrot.lane.b32.xlu0 %v1245, 96
        %v1889 = vpop.permute.xlu0 %1888
        %1890 = vrot.lane.b32.xlu0 %v1250, 96
        %v1891 = vpop.permute.xlu0 %1890
        %1892 = vrot.lane.b32.xlu0 %v1253, 96
        %v1893 = vpop.permute.xlu0 %1892
        %1894 = vrot.lane.b32.xlu0 %v1258, 96
        %v1895 = vpop.permute.xlu0 %1894
        %1896 = vrot.lane.b32.xlu0 %v1261, 96
        %v1897 = vpop.permute.xlu0 %1896
        %1898 = vrot.lane.b32.xlu0 %v1266, 96
        %v1899 = vpop.permute.xlu0 %1898
        %1900 = vrot.lane.b32.xlu0 %v1269, 96
        %v1901 = vpop.permute.xlu0 %1900
        %1902 = vrot.lane.b32.xlu0 %v1282, 96
        %v1903 = vpop.permute.xlu0 %1902
        %1904 = vrot.lane.b32.xlu0 %v1285, 96
        %v1905 = vpop.permute.xlu0 %1904
        %1906 = vrot.lane.b32.xlu0 %v1290, 96
        %v1907 = vpop.permute.xlu0 %1906
        %1908 = vrot.lane.b32.xlu0 %v1293, 96
        %v1909 = vpop.permute.xlu0 %1908
        %1910 = vrot.lane.b32.xlu0 %v1298, 96
        %v1911 = vpop.permute.xlu0 %1910
        %1912 = vrot.lane.b32.xlu0 %v1301, 96
        %v1913 = vpop.permute.xlu0 %1912
        %1914 = vrot.lane.b32.xlu0 %v1306, 96
        %v1915 = vpop.permute.xlu0 %1914
        %1916 = vrot.lane.b32.xlu0 %v1309, 96
        %v1917 = vpop.permute.xlu0 %1916
        %1918 = vrot.lane.b32.xlu0 %v1314, 96
        %v1919 = vpop.permute.xlu0 %1918
        %1920 = vrot.lane.b32.xlu0 %v1317, 96
        %v1921 = vpop.permute.xlu0 %1920
        %1922 = vrot.lane.b32.xlu0 %v1322, 96
        %v1923 = vpop.permute.xlu0 %1922
        %1924 = vrot.lane.b32.xlu0 %v1325, 96
        %v1925 = vpop.permute.xlu0 %1924
        %1926 = vrot.lane.b32.xlu0 %v1338, 96
        %v1927 = vpop.permute.xlu0 %1926
        %1928 = vrot.lane.b32.xlu0 %v1341, 96
        %v1929 = vpop.permute.xlu0 %1928
        %1930 = vrot.lane.b32.xlu0 %v1346, 96
        %v1931 = vpop.permute.xlu0 %1930
        %1932 = vrot.lane.b32.xlu0 %v1349, 96
        %v1933 = vpop.permute.xlu0 %1932
        %1934 = vrot.lane.b32.xlu0 %v1354, 96
        %v1935 = vpop.permute.xlu0 %1934
        %1936 = vrot.lane.b32.xlu0 %v1357, 96
        %v1937 = vpop.permute.xlu0 %1936
        %1938 = vrot.lane.b32.xlu0 %v1362, 96
        %v1939 = vpop.permute.xlu0 %1938
        %1940 = vrot.lane.b32.xlu0 %v1365, 96
        %v1941 = vpop.permute.xlu0 %1940
        %1942 = vrot.lane.b32.xlu0 %v1370, 96
        %v1943 = vpop.permute.xlu0 %1942
        %1944 = vrot.lane.b32.xlu0 %v1373, 96
        %v1945 = vpop.permute.xlu0 %1944
        %1946 = vrot.lane.b32.xlu0 %v1378, 96
        %v1947 = vpop.permute.xlu0 %1946
        %1948 = vrot.lane.b32.xlu0 %v1381, 96
        %v1949 = vpop.permute.xlu0 %1948
        %1950 = vrot.lane.b32.xlu0 %v1394, 96
        %v1951 = vpop.permute.xlu0 %1950
        %1952 = vrot.lane.b32.xlu0 %v1397, 96
        %v1953 = vpop.permute.xlu0 %1952
        %1954 = vrot.lane.b32.xlu0 %v1402, 96
        %v1955 = vpop.permute.xlu0 %1954
        %1956 = vrot.lane.b32.xlu0 %v1405, 96
        %v1957 = vpop.permute.xlu0 %1956
        %1958 = vrot.lane.b32.xlu0 %v1410, 96
        %v1959 = vpop.permute.xlu0 %1958
        %1960 = vrot.lane.b32.xlu0 %v1413, 96
        %v1961 = vpop.permute.xlu0 %1960
        %1962 = vrot.lane.b32.xlu0 %v1418, 96
        %v1963 = vpop.permute.xlu0 %1962
        %1964 = vrot.lane.b32.xlu0 %v1421, 96
        %v1965 = vpop.permute.xlu0 %1964
        %1966 = vrot.lane.b32.xlu0 %v1426, 96
        %v1967 = vpop.permute.xlu0 %1966
        %1968 = vrot.lane.b32.xlu0 %v1429, 96
        %v1969 = vpop.permute.xlu0 %1968
        %1970 = vrot.lane.b32.xlu0 %v1434, 96
        %v1971 = vpop.permute.xlu0 %1970
        %1972 = vrot.lane.b32.xlu0 %v1437, 96
        %v1973 = vpop.permute.xlu0 %1972
        %v2046 = vadd.f32 %v1736, %v1831
        %v2047 = vadd.f32 %v1737, %v1833
        %v2048 = vadd.f32 %v1738, %v1835
        %v2049 = vadd.f32 %v1739, %v1837
        %v2050 = vadd.f32 %v1740, %v1839
        %v2051 = vadd.f32 %v1741, %v1841
        %v2052 = vadd.f32 %v1742, %v1843
        %v2053 = vadd.f32 %v1743, %v1845
        %v2054 = vadd.f32 %v1744, %v1847
        %v2055 = vadd.f32 %v1745, %v1849
        %v2056 = vadd.f32 %v1746, %v1851
        %v2057 = vadd.f32 %v1747, %v1853
        %v2058 = vadd.f32 %v1748, %v1855
        %v2059 = vadd.f32 %v1749, %v1857
        %v2060 = vadd.f32 %v1750, %v1859
        %v2061 = vadd.f32 %v1751, %v1861
        %v2062 = vadd.f32 %v1752, %v1863
        %v2063 = vadd.f32 %v1753, %v1865
        %v2064 = vadd.f32 %v1754, %v1867
        %v2065 = vadd.f32 %v1755, %v1869
        %v2066 = vadd.f32 %v1756, %v1871
        %v2067 = vadd.f32 %v1757, %v1873
        %v2068 = vadd.f32 %v1758, %v1875
        %v2069 = vadd.f32 %v1759, %v1877
        %v2070 = vadd.f32 %v1760, %v1879
        %v2071 = vadd.f32 %v1761, %v1881
        %v2072 = vadd.f32 %v1762, %v1883
        %v2073 = vadd.f32 %v1763, %v1885
        %v2074 = vadd.f32 %v1764, %v1887
        %v2075 = vadd.f32 %v1765, %v1889
        %v2076 = vadd.f32 %v1766, %v1891
        %v2077 = vadd.f32 %v1767, %v1893
        %v2078 = vadd.f32 %v1768, %v1895
        %v2079 = vadd.f32 %v1769, %v1897
        %v2080 = vadd.f32 %v1770, %v1899
        %v2081 = vadd.f32 %v1771, %v1901
        %v2082 = vadd.f32 %v1772, %v1903
        %v2083 = vadd.f32 %v1773, %v1905
        %v2084 = vadd.f32 %v1774, %v1907
        %v2085 = vadd.f32 %v1775, %v1909
        %v2086 = vadd.f32 %v1776, %v1911
        %v2087 = vadd.f32 %v1777, %v1913
        %v2088 = vadd.f32 %v1778, %v1915
        %v2089 = vadd.f32 %v1779, %v1917
        %v2090 = vadd.f32 %v1780, %v1919
        %v2091 = vadd.f32 %v1781, %v1921
        %v2092 = vadd.f32 %v1782, %v1923
        %v2093 = vadd.f32 %v1783, %v1925
        %v2094 = vadd.f32 %v1784, %v1927
        %v2095 = vadd.f32 %v1785, %v1929
        %v2096 = vadd.f32 %v1786, %v1931
        %v2097 = vadd.f32 %v1787, %v1933
        %v2098 = vadd.f32 %v1788, %v1935
        %v2099 = vadd.f32 %v1789, %v1937
        %v2100 = vadd.f32 %v1790, %v1939
        %v2101 = vadd.f32 %v1791, %v1941
        %v2102 = vadd.f32 %v1792, %v1943
        %v2103 = vadd.f32 %v1793, %v1945
        %v2104 = vadd.f32 %v1794, %v1947
        %v2105 = vadd.f32 %v1795, %v1949
        %v2106 = vadd.f32 %v1796, %v1951
        %v2107 = vadd.f32 %v1797, %v1953
        %v2108 = vadd.f32 %v1798, %v1955
        %v2109 = vadd.f32 %v1799, %v1957
        %v2110 = vadd.f32 %v1800, %v1959
        %v2111 = vadd.f32 %v1801, %v1961
        %v2112 = vadd.f32 %v1802, %v1963
        %v2113 = vadd.f32 %v1803, %v1965
        %v2114 = vadd.f32 %v1804, %v1967
        %v2115 = vadd.f32 %v1805, %v1969
        %v2116 = vadd.f32 %v1806, %v1971
        %v2117 = vadd.f32 %v1807, %v1973
        %2120 = vrot.lane.b32.xlu0 %v1122, 80
        %v2121 = vpop.permute.xlu0 %2120
        %2122 = vrot.lane.b32.xlu0 %v1125, 80
        %v2123 = vpop.permute.xlu0 %2122
        %2124 = vrot.lane.b32.xlu0 %v1130, 80
        %v2125 = vpop.permute.xlu0 %2124
        %2126 = vrot.lane.b32.xlu0 %v1133, 80
        %v2127 = vpop.permute.xlu0 %2126
        %2128 = vrot.lane.b32.xlu0 %v1138, 80
        %v2129 = vpop.permute.xlu0 %2128
        %2130 = vrot.lane.b32.xlu0 %v1141, 80
        %v2131 = vpop.permute.xlu0 %2130
        %2132 = vrot.lane.b32.xlu0 %v1146, 80
        %v2133 = vpop.permute.xlu0 %2132
        %2134 = vrot.lane.b32.xlu0 %v1149, 80
        %v2135 = vpop.permute.xlu0 %2134
        %2136 = vrot.lane.b32.xlu0 %v1154, 80
        %v2137 = vpop.permute.xlu0 %2136
        %2138 = vrot.lane.b32.xlu0 %v1157, 80
        %v2139 = vpop.permute.xlu0 %2138
        %2140 = vrot.lane.b32.xlu0 %v1162, 80
        %v2141 = vpop.permute.xlu0 %2140
        %2142 = vrot.lane.b32.xlu0 %v1165, 80
        %v2143 = vpop.permute.xlu0 %2142
        %2144 = vrot.lane.b32.xlu0 %v1178, 80
        %v2145 = vpop.permute.xlu0 %2144
        %2146 = vrot.lane.b32.xlu0 %v1181, 80
        %v2147 = vpop.permute.xlu0 %2146
        %2148 = vrot.lane.b32.xlu0 %v1186, 80
        %v2149 = vpop.permute.xlu0 %2148
        %2150 = vrot.lane.b32.xlu0 %v1189, 80
        %v2151 = vpop.permute.xlu0 %2150
        %2152 = vrot.lane.b32.xlu0 %v1194, 80
        %v2153 = vpop.permute.xlu0 %2152
        %2154 = vrot.lane.b32.xlu0 %v1197, 80
        %v2155 = vpop.permute.xlu0 %2154
        %2156 = vrot.lane.b32.xlu0 %v1202, 80
        %v2157 = vpop.permute.xlu0 %2156
        %2158 = vrot.lane.b32.xlu0 %v1205, 80
        %v2159 = vpop.permute.xlu0 %2158
        %2160 = vrot.lane.b32.xlu0 %v1210, 80
        %v2161 = vpop.permute.xlu0 %2160
        %2162 = vrot.lane.b32.xlu0 %v1213, 80
        %v2163 = vpop.permute.xlu0 %2162
        %2164 = vrot.lane.b32.xlu0 %v1218, 80
        %v2165 = vpop.permute.xlu0 %2164
        %2166 = vrot.lane.b32.xlu0 %v1221, 80
        %v2167 = vpop.permute.xlu0 %2166
        %2168 = vrot.lane.b32.xlu0 %v1234, 80
        %v2169 = vpop.permute.xlu0 %2168
        %2170 = vrot.lane.b32.xlu0 %v1237, 80
        %v2171 = vpop.permute.xlu0 %2170
        %2172 = vrot.lane.b32.xlu0 %v1242, 80
        %v2173 = vpop.permute.xlu0 %2172
        %2174 = vrot.lane.b32.xlu0 %v1245, 80
        %v2175 = vpop.permute.xlu0 %2174
        %2176 = vrot.lane.b32.xlu0 %v1250, 80
        %v2177 = vpop.permute.xlu0 %2176
        %2178 = vrot.lane.b32.xlu0 %v1253, 80
        %v2179 = vpop.permute.xlu0 %2178
        %2180 = vrot.lane.b32.xlu0 %v1258, 80
        %v2181 = vpop.permute.xlu0 %2180
        %2182 = vrot.lane.b32.xlu0 %v1261, 80
        %v2183 = vpop.permute.xlu0 %2182
        %2184 = vrot.lane.b32.xlu0 %v1266, 80
        %v2185 = vpop.permute.xlu0 %2184
        %2186 = vrot.lane.b32.xlu0 %v1269, 80
        %v2187 = vpop.permute.xlu0 %2186
        %2188 = vrot.lane.b32.xlu0 %v1274, 80
        %v2189 = vpop.permute.xlu0 %2188
        %2190 = vrot.lane.b32.xlu0 %v1277, 80
        %v2191 = vpop.permute.xlu0 %2190
        %2192 = vrot.lane.b32.xlu0 %v1290, 80
        %v2193 = vpop.permute.xlu0 %2192
        %2194 = vrot.lane.b32.xlu0 %v1293, 80
        %v2195 = vpop.permute.xlu0 %2194
        %2196 = vrot.lane.b32.xlu0 %v1298, 80
        %v2197 = vpop.permute.xlu0 %2196
        %2198 = vrot.lane.b32.xlu0 %v1301, 80
        %v2199 = vpop.permute.xlu0 %2198
        %2200 = vrot.lane.b32.xlu0 %v1306, 80
        %v2201 = vpop.permute.xlu0 %2200
        %2202 = vrot.lane.b32.xlu0 %v1309, 80
        %v2203 = vpop.permute.xlu0 %2202
        %2204 = vrot.lane.b32.xlu0 %v1314, 80
        %v2205 = vpop.permute.xlu0 %2204
        %2206 = vrot.lane.b32.xlu0 %v1317, 80
        %v2207 = vpop.permute.xlu0 %2206
        %2208 = vrot.lane.b32.xlu0 %v1322, 80
        %v2209 = vpop.permute.xlu0 %2208
        %2210 = vrot.lane.b32.xlu0 %v1325, 80
        %v2211 = vpop.permute.xlu0 %2210
        %2212 = vrot.lane.b32.xlu0 %v1330, 80
        %v2213 = vpop.permute.xlu0 %2212
        %2214 = vrot.lane.b32.xlu0 %v1333, 80
        %v2215 = vpop.permute.xlu0 %2214
        %2216 = vrot.lane.b32.xlu0 %v1346, 80
        %v2217 = vpop.permute.xlu0 %2216
        %2218 = vrot.lane.b32.xlu0 %v1349, 80
        %v2219 = vpop.permute.xlu0 %2218
        %2220 = vrot.lane.b32.xlu0 %v1354, 80
        %v2221 = vpop.permute.xlu0 %2220
        %2222 = vrot.lane.b32.xlu0 %v1357, 80
        %v2223 = vpop.permute.xlu0 %2222
        %2224 = vrot.lane.b32.xlu0 %v1362, 80
        %v2225 = vpop.permute.xlu0 %2224
        %2226 = vrot.lane.b32.xlu0 %v1365, 80
        %v2227 = vpop.permute.xlu0 %2226
        %2228 = vrot.lane.b32.xlu0 %v1370, 80
        %v2229 = vpop.permute.xlu0 %2228
        %2230 = vrot.lane.b32.xlu0 %v1373, 80
        %v2231 = vpop.permute.xlu0 %2230
        %2232 = vrot.lane.b32.xlu0 %v1378, 80
        %v2233 = vpop.permute.xlu0 %2232
        %2234 = vrot.lane.b32.xlu0 %v1381, 80
        %v2235 = vpop.permute.xlu0 %2234
        %2236 = vrot.lane.b32.xlu0 %v1386, 80
        %v2237 = vpop.permute.xlu0 %2236
        %2238 = vrot.lane.b32.xlu0 %v1389, 80
        %v2239 = vpop.permute.xlu0 %2238
        %2240 = vrot.lane.b32.xlu0 %v1402, 80
        %v2241 = vpop.permute.xlu0 %2240
        %2242 = vrot.lane.b32.xlu0 %v1405, 80
        %v2243 = vpop.permute.xlu0 %2242
        %2244 = vrot.lane.b32.xlu0 %v1410, 80
        %v2245 = vpop.permute.xlu0 %2244
        %2246 = vrot.lane.b32.xlu0 %v1413, 80
        %v2247 = vpop.permute.xlu0 %2246
        %2248 = vrot.lane.b32.xlu0 %v1418, 80
        %v2249 = vpop.permute.xlu0 %2248
        %2250 = vrot.lane.b32.xlu0 %v1421, 80
        %v2251 = vpop.permute.xlu0 %2250
        %2252 = vrot.lane.b32.xlu0 %v1426, 80
        %v2253 = vpop.permute.xlu0 %2252
        %2254 = vrot.lane.b32.xlu0 %v1429, 80
        %v2255 = vpop.permute.xlu0 %2254
        %2256 = vrot.lane.b32.xlu0 %v1434, 80
        %v2257 = vpop.permute.xlu0 %2256
        %2258 = vrot.lane.b32.xlu0 %v1437, 80
        %v2259 = vpop.permute.xlu0 %2258
        %2260 = vrot.lane.b32.xlu0 %v1442, 80
        %v2261 = vpop.permute.xlu0 %2260
        %2262 = vrot.lane.b32.xlu0 %v1445, 80
        %v2263 = vpop.permute.xlu0 %2262
        %v2336 = vadd.f32 %v2046, %v2121
        %v2337 = vadd.f32 %v2047, %v2123
        %v2338 = vadd.f32 %v2048, %v2125
        %v2339 = vadd.f32 %v2049, %v2127
        %v2340 = vadd.f32 %v2050, %v2129
        %v2341 = vadd.f32 %v2051, %v2131
        %v2342 = vadd.f32 %v2052, %v2133
        %v2343 = vadd.f32 %v2053, %v2135
        %v2344 = vadd.f32 %v2054, %v2137
        %v2345 = vadd.f32 %v2055, %v2139
        %v2346 = vadd.f32 %v2056, %v2141
        %v2347 = vadd.f32 %v2057, %v2143
        %v2348 = vadd.f32 %v2058, %v2145
        %v2349 = vadd.f32 %v2059, %v2147
        %v2350 = vadd.f32 %v2060, %v2149
        %v2351 = vadd.f32 %v2061, %v2151
        %v2352 = vadd.f32 %v2062, %v2153
        %v2353 = vadd.f32 %v2063, %v2155
        %v2354 = vadd.f32 %v2064, %v2157
        %v2355 = vadd.f32 %v2065, %v2159
        %v2356 = vadd.f32 %v2066, %v2161
        %v2357 = vadd.f32 %v2067, %v2163
        %v2358 = vadd.f32 %v2068, %v2165
        %v2359 = vadd.f32 %v2069, %v2167
        %v2360 = vadd.f32 %v2070, %v2169
        %v2361 = vadd.f32 %v2071, %v2171
        %v2362 = vadd.f32 %v2072, %v2173
        %v2363 = vadd.f32 %v2073, %v2175
        %v2364 = vadd.f32 %v2074, %v2177
        %v2365 = vadd.f32 %v2075, %v2179
        %v2366 = vadd.f32 %v2076, %v2181
        %v2367 = vadd.f32 %v2077, %v2183
        %v2368 = vadd.f32 %v2078, %v2185
        %v2369 = vadd.f32 %v2079, %v2187
        %v2370 = vadd.f32 %v2080, %v2189
        %v2371 = vadd.f32 %v2081, %v2191
        %v2372 = vadd.f32 %v2082, %v2193
        %v2373 = vadd.f32 %v2083, %v2195
        %v2374 = vadd.f32 %v2084, %v2197
        %v2375 = vadd.f32 %v2085, %v2199
        %v2376 = vadd.f32 %v2086, %v2201
        %v2377 = vadd.f32 %v2087, %v2203
        %v2378 = vadd.f32 %v2088, %v2205
        %v2379 = vadd.f32 %v2089, %v2207
        %v2380 = vadd.f32 %v2090, %v2209
        %v2381 = vadd.f32 %v2091, %v2211
        %v2382 = vadd.f32 %v2092, %v2213
        %v2383 = vadd.f32 %v2093, %v2215
        %v2384 = vadd.f32 %v2094, %v2217
        %v2385 = vadd.f32 %v2095, %v2219
        %v2386 = vadd.f32 %v2096, %v2221
        %v2387 = vadd.f32 %v2097, %v2223
        %v2388 = vadd.f32 %v2098, %v2225
        %v2389 = vadd.f32 %v2099, %v2227
        %v2390 = vadd.f32 %v2100, %v2229
        %v2391 = vadd.f32 %v2101, %v2231
        %v2392 = vadd.f32 %v2102, %v2233
        %v2393 = vadd.f32 %v2103, %v2235
        %v2394 = vadd.f32 %v2104, %v2237
        %v2395 = vadd.f32 %v2105, %v2239
        %v2396 = vadd.f32 %v2106, %v2241
        %v2397 = vadd.f32 %v2107, %v2243
        %v2398 = vadd.f32 %v2108, %v2245
        %v2399 = vadd.f32 %v2109, %v2247
        %v2400 = vadd.f32 %v2110, %v2249
        %v2401 = vadd.f32 %v2111, %v2251
        %v2402 = vadd.f32 %v2112, %v2253
        %v2403 = vadd.f32 %v2113, %v2255
        %v2404 = vadd.f32 %v2114, %v2257
        %v2405 = vadd.f32 %v2115, %v2259
        %v2406 = vadd.f32 %v2116, %v2261
        %v2407 = vadd.f32 %v2117, %v2263
        %2426 = vrot.lane.b32.xlu0 %v2338, 16
        %v2427 = vpop.permute.xlu0 %2426
        %2428 = vrot.lane.b32.xlu0 %v2339, 16
        %v2429 = vpop.permute.xlu0 %2428
        %2430 = vrot.lane.b32.xlu0 %v2342, 16
        %v2431 = vpop.permute.xlu0 %2430
        %2432 = vrot.lane.b32.xlu0 %v2343, 16
        %v2433 = vpop.permute.xlu0 %2432
        %2434 = vrot.lane.b32.xlu0 %v2346, 16
        %v2435 = vpop.permute.xlu0 %2434
        %2436 = vrot.lane.b32.xlu0 %v2347, 16
        %v2437 = vpop.permute.xlu0 %2436
        %2438 = vrot.lane.b32.xlu0 %v2362, 16
        %v2439 = vpop.permute.xlu0 %2438
        %2440 = vrot.lane.b32.xlu0 %v2363, 16
        %v2441 = vpop.permute.xlu0 %2440
        %2442 = vrot.lane.b32.xlu0 %v2366, 16
        %v2443 = vpop.permute.xlu0 %2442
        %2444 = vrot.lane.b32.xlu0 %v2367, 16
        %v2445 = vpop.permute.xlu0 %2444
        %2446 = vrot.lane.b32.xlu0 %v2370, 16
        %v2447 = vpop.permute.xlu0 %2446
        %2448 = vrot.lane.b32.xlu0 %v2371, 16
        %v2449 = vpop.permute.xlu0 %2448
        %2450 = vrot.lane.b32.xlu0 %v2386, 16
        %v2451 = vpop.permute.xlu0 %2450
        %2452 = vrot.lane.b32.xlu0 %v2387, 16
        %v2453 = vpop.permute.xlu0 %2452
        %2454 = vrot.lane.b32.xlu0 %v2390, 16
        %v2455 = vpop.permute.xlu0 %2454
        %2456 = vrot.lane.b32.xlu0 %v2391, 16
        %v2457 = vpop.permute.xlu0 %2456
        %2458 = vrot.lane.b32.xlu0 %v2394, 16
        %v2459 = vpop.permute.xlu0 %2458
        %2460 = vrot.lane.b32.xlu0 %v2395, 16
        %v2461 = vpop.permute.xlu0 %2460
        %2498 = vrot.lane.b32.xlu0 %v2348, 32
        %v2499 = vpop.permute.xlu0 %2498
        %2500 = vrot.lane.b32.xlu0 %v2349, 32
        %v2501 = vpop.permute.xlu0 %2500
        %2502 = vrot.lane.b32.xlu0 %v2352, 32
        %v2503 = vpop.permute.xlu0 %2502
        %2504 = vrot.lane.b32.xlu0 %v2353, 32
        %v2505 = vpop.permute.xlu0 %2504
        %2506 = vrot.lane.b32.xlu0 %v2356, 32
        %v2507 = vpop.permute.xlu0 %2506
        %2508 = vrot.lane.b32.xlu0 %v2357, 32
        %v2509 = vpop.permute.xlu0 %2508
        %2510 = vrot.lane.b32.xlu0 %v2372, 32
        %v2511 = vpop.permute.xlu0 %2510
        %2512 = vrot.lane.b32.xlu0 %v2373, 32
        %v2513 = vpop.permute.xlu0 %2512
        %2514 = vrot.lane.b32.xlu0 %v2376, 32
        %v2515 = vpop.permute.xlu0 %2514
        %2516 = vrot.lane.b32.xlu0 %v2377, 32
        %v2517 = vpop.permute.xlu0 %2516
        %2518 = vrot.lane.b32.xlu0 %v2380, 32
        %v2519 = vpop.permute.xlu0 %2518
        %2520 = vrot.lane.b32.xlu0 %v2381, 32
        %v2521 = vpop.permute.xlu0 %2520
        %2522 = vrot.lane.b32.xlu0 %v2396, 32
        %v2523 = vpop.permute.xlu0 %2522
        %2524 = vrot.lane.b32.xlu0 %v2397, 32
        %v2525 = vpop.permute.xlu0 %2524
        %2526 = vrot.lane.b32.xlu0 %v2400, 32
        %v2527 = vpop.permute.xlu0 %2526
        %2528 = vrot.lane.b32.xlu0 %v2401, 32
        %v2529 = vpop.permute.xlu0 %2528
        %2530 = vrot.lane.b32.xlu0 %v2404, 32
        %v2531 = vpop.permute.xlu0 %2530
        %2532 = vrot.lane.b32.xlu0 %v2405, 32
        %v2533 = vpop.permute.xlu0 %2532
        %2570 = vrot.lane.b32.xlu0 %v2350, 48
        %v2571 = vpop.permute.xlu0 %2570
        %2572 = vrot.lane.b32.xlu0 %v2351, 48
        %v2573 = vpop.permute.xlu0 %2572
        %2574 = vrot.lane.b32.xlu0 %v2354, 48
        %v2575 = vpop.permute.xlu0 %2574
        %2576 = vrot.lane.b32.xlu0 %v2355, 48
        %v2577 = vpop.permute.xlu0 %2576
        %2578 = vrot.lane.b32.xlu0 %v2358, 48
        %v2579 = vpop.permute.xlu0 %2578
        %2580 = vrot.lane.b32.xlu0 %v2359, 48
        %v2581 = vpop.permute.xlu0 %2580
        %2582 = vrot.lane.b32.xlu0 %v2374, 48
        %v2583 = vpop.permute.xlu0 %2582
        %2584 = vrot.lane.b32.xlu0 %v2375, 48
        %v2585 = vpop.permute.xlu0 %2584
        %2586 = vrot.lane.b32.xlu0 %v2378, 48
        %v2587 = vpop.permute.xlu0 %2586
        %2588 = vrot.lane.b32.xlu0 %v2379, 48
        %v2589 = vpop.permute.xlu0 %2588
        %2590 = vrot.lane.b32.xlu0 %v2382, 48
        %v2591 = vpop.permute.xlu0 %2590
        %2592 = vrot.lane.b32.xlu0 %v2383, 48
        %v2593 = vpop.permute.xlu0 %2592
        %2594 = vrot.lane.b32.xlu0 %v2398, 48
        %v2595 = vpop.permute.xlu0 %2594
        %2596 = vrot.lane.b32.xlu0 %v2399, 48
        %v2597 = vpop.permute.xlu0 %2596
        %2598 = vrot.lane.b32.xlu0 %v2402, 48
        %v2599 = vpop.permute.xlu0 %2598
        %2600 = vrot.lane.b32.xlu0 %v2403, 48
        %v2601 = vpop.permute.xlu0 %2600
        %2602 = vrot.lane.b32.xlu0 %v2406, 48
        %v2603 = vpop.permute.xlu0 %2602
        %2604 = vrot.lane.b32.xlu0 %v2407, 48
        %v2605 = vpop.permute.xlu0 %2604
        %vm2624 = vcmask 130048
        %v2625 = vsel %vm2624, %v2336, %v2427
        %v2626 = vsel %vm2624, %v2337, %v2429
        %v2627 = vsel %vm2624, %v2340, %v2431
        %v2628 = vsel %vm2624, %v2341, %v2433
        %v2629 = vsel %vm2624, %v2344, %v2435
        %v2630 = vsel %vm2624, %v2345, %v2437
        %v2631 = vsel %vm2624, %v2360, %v2439
        %v2632 = vsel %vm2624, %v2361, %v2441
        %v2633 = vsel %vm2624, %v2364, %v2443
        %v2634 = vsel %vm2624, %v2365, %v2445
        %v2635 = vsel %vm2624, %v2368, %v2447
        %v2636 = vsel %vm2624, %v2369, %v2449
        %v2637 = vsel %vm2624, %v2384, %v2451
        %v2638 = vsel %vm2624, %v2385, %v2453
        %v2639 = vsel %vm2624, %v2388, %v2455
        %v2640 = vsel %vm2624, %v2389, %v2457
        %v2641 = vsel %vm2624, %v2392, %v2459
        %v2642 = vsel %vm2624, %v2393, %v2461
        %vm2643 = vcmask 261120
        %v2644 = vsel %vm2643, %v2625, %v2499
        %v2645 = vsel %vm2643, %v2626, %v2501
        %v2646 = vsel %vm2643, %v2627, %v2503
        %v2647 = vsel %vm2643, %v2628, %v2505
        %v2648 = vsel %vm2643, %v2629, %v2507
        %v2649 = vsel %vm2643, %v2630, %v2509
        %v2650 = vsel %vm2643, %v2631, %v2511
        %v2651 = vsel %vm2643, %v2632, %v2513
        %v2652 = vsel %vm2643, %v2633, %v2515
        %v2653 = vsel %vm2643, %v2634, %v2517
        %v2654 = vsel %vm2643, %v2635, %v2519
        %v2655 = vsel %vm2643, %v2636, %v2521
        %v2656 = vsel %vm2643, %v2637, %v2523
        %v2657 = vsel %vm2643, %v2638, %v2525
        %v2658 = vsel %vm2643, %v2639, %v2527
        %v2659 = vsel %vm2643, %v2640, %v2529
        %v2660 = vsel %vm2643, %v2641, %v2531
        %v2661 = vsel %vm2643, %v2642, %v2533
        %v2662 = vsel %vm875, %v2644, %v2571
        %v2663 = vsel %vm875, %v2645, %v2573
        %v2664 = vsel %vm875, %v2646, %v2575
        %v2665 = vsel %vm875, %v2647, %v2577
        %v2666 = vsel %vm875, %v2648, %v2579
        %v2667 = vsel %vm875, %v2649, %v2581
        %v2668 = vsel %vm875, %v2650, %v2583
        %v2669 = vsel %vm875, %v2651, %v2585
        %v2670 = vsel %vm875, %v2652, %v2587
        %v2671 = vsel %vm875, %v2653, %v2589
        %v2672 = vsel %vm875, %v2654, %v2591
        %v2673 = vsel %vm875, %v2655, %v2593
        %v2674 = vsel %vm875, %v2656, %v2595
        %v2675 = vsel %vm875, %v2657, %v2597
        %v2676 = vsel %vm875, %v2658, %v2599
        %v2677 = vsel %vm875, %v2659, %v2601
        %v2678 = vsel %vm875, %v2660, %v2603
        %v2679 = vsel %vm875, %v2661, %v2605
        %v2680 = vld [vmem:[%s2] sm:$0x1]
        %v2682 = vlaneseq
        %v2683 = vshrl.u32 %v2682, 7
        %v2684 = vsub.s32 0, %v2683
        %v2685 = vrot.slane %v2680, %v2684
        %v2687 = vadd.f32 %v2662, %v2685
        %v2688 = vadd.f32 %v2663, %v2685
        %v2689 = vadd.f32 %v2664, %v2685
        %v2690 = vadd.f32 %v2665, %v2685
        %v2691 = vadd.f32 %v2666, %v2685
        %v2692 = vadd.f32 %v2667, %v2685
        %v2693 = vadd.f32 %v2668, %v2685
        %v2694 = vadd.f32 %v2669, %v2685
        %v2695 = vadd.f32 %v2670, %v2685
        %v2696 = vadd.f32 %v2671, %v2685
        %v2697 = vadd.f32 %v2672, %v2685
        %v2698 = vadd.f32 %v2673, %v2685
        %v2699 = vadd.f32 %v2674, %v2685
        %v2700 = vadd.f32 %v2675, %v2685
        %v2701 = vadd.f32 %v2676, %v2685
        %v2702 = vadd.f32 %v2677, %v2685
        %v2703 = vadd.f32 %v2678, %v2685
        %v2704 = vadd.f32 %v2679, %v2685
        %v2705 = vmax.f32 %v2687, 0.0
        %v2706 = vmax.f32 %v2688, 0.0
        %v2707 = vmax.f32 %v2689, 0.0
        %v2708 = vmax.f32 %v2690, 0.0
        %v2709 = vmax.f32 %v2691, 0.0
        %v2710 = vmax.f32 %v2692, 0.0
        %v2711 = vmax.f32 %v2693, 0.0
        %v2712 = vmax.f32 %v2694, 0.0
        %v2713 = vmax.f32 %v2695, 0.0
        %v2714 = vmax.f32 %v2696, 0.0
        %v2715 = vmax.f32 %v2697, 0.0
        %v2716 = vmax.f32 %v2698, 0.0
        %v2717 = vmax.f32 %v2699, 0.0
        %v2718 = vmax.f32 %v2700, 0.0
        %v2719 = vmax.f32 %v2701, 0.0
        %v2720 = vmax.f32 %v2702, 0.0
        %v2721 = vmax.f32 %v2703, 0.0
        %v2722 = vmax.f32 %v2704, 0.0
        %v2723 = vpack.c.bf16 %v2706, %v2705
        %v2724 = vpack.c.bf16 %v2708, %v2707
        %v2725 = vpack.c.bf16 %v2710, %v2709
        %v2726 = vpack.c.bf16 %v2712, %v2711
        %v2727 = vpack.c.bf16 %v2714, %v2713
        %v2728 = vpack.c.bf16 %v2716, %v2715
        %v2729 = vpack.c.bf16 %v2718, %v2717
        %v2730 = vpack.c.bf16 %v2720, %v2719
        %v2731 = vpack.c.bf16 %v2722, %v2721
        %v2732 = vld [vmem:[%s3] sm:$0xf]
        %v2733 = vld [vmem:[%s3 + $0x4] sm:$0xf]
        %v2734 = vld [vmem:[%s3 + $0x8] sm:$0xf]
        %v2735 = vld [vmem:[%s3 + $0xc] sm:$0xf]
        %v2736 = vld [vmem:[%s3 + $0x10] sm:$0xf]
        %v2737 = vld [vmem:[%s3 + $0x14] sm:$0xf]
        %v2738 = vld [vmem:[%s3 + $0x18] sm:$0xf]
        %v2739 = vld [vmem:[%s3 + $0x1c] sm:$0xf]
        %v2748 = vunpack.c.l.b16 %v2732
        %v2749 = vunpack.c.l.b16 %v2733
        %v2750 = vunpack.c.l.b16 %v2734
        %v2751 = vunpack.c.l.b16 %v2735
        %v2752 = vunpack.c.l.b16 %v2736
        %v2753 = vunpack.c.l.b16 %v2737
        %v2754 = vunpack.c.l.b16 %v2738
        %v2755 = vunpack.c.l.b16 %v2739
        %v2756 = vpack.c.b16 %v2749, %v2748
        %v2757 = vpack.c.b16 %v2751, %v2750
        %v2758 = vpack.c.b16 %v2753, %v2752
        %v2759 = vpack.c.b16 %v2755, %v2754
        %vm2764 = vcmask 523264
        %v2766 = vsel %vm2764, %v2723, 0
        %v2769 = vsel %vm2764, %v2724, 0
        %v2772 = vsel %vm2764, %v2725, 0
        %v2775 = vsel %vm2764, %v2726, 0
        %v2778 = vsel %vm2764, %v2727, 0
        %v2781 = vsel %vm2764, %v2728, 0
        %v2784 = vsel %vm2764, %v2729, 0
        %v2787 = vsel %vm2764, %v2730, 0
        %v2790 = vsel %vm2764, %v2731, 0
        %2792 = vmatprep.subr.bf16.mxu0 0
        %2793 = vmatpush1.bf16.msra.mxu0 0
        %2794 = vmatprep.subr.bf16.mxu0 0
        %2795 = vmatpush1.bf16.msra.mxu0 0
        %2796 = vmatprep.subr.bf16.mxu0 0
        %2797 = vmatpush1.bf16.msra.mxu0 0
        %2798 = vmatprep.subr.bf16.mxu0 0
        %2799 = vmatpush1.bf16.msra.mxu0 0
        %2800 = vmatprep.subr.bf16.mxu0 0
        %2801 = vmatpush1.bf16.msra.mxu0 %v2759
        %2802 = vmatprep.subr.bf16.mxu0 0
        %2803 = vmatpush1.bf16.msra.mxu0 %v2758
        %2804 = vmatprep.subr.bf16.mxu0 0
        %2805 = vmatpush1.bf16.msra.mxu0 %v2757
        %2806 = vmatprep.subr.bf16.mxu0 0
        %2807 = vmatpush1.bf16.msra.mxu0 %v2756
        %2808 = vmatprep.subr.bf16.mxu0 0
        %2809 = vmatpush2.bf16.msra.mxu0 0
        %2810 = vmatprep.subr.bf16.mxu0 0
        %2811 = vmatpush2.bf16.msra.mxu0 0
        %2812 = vmatprep.subr.bf16.mxu0 0
        %2813 = vmatpush2.bf16.msra.mxu0 0
        %2814 = vmatprep.subr.bf16.mxu0 0
        %2815 = vmatpush2.bf16.msra.mxu0 0
        %2816 = vmatprep.subr.bf16.mxu0 0
        %2817 = vmatpush2.bf16.msra.mxu0 0
        %2818 = vmatprep.subr.bf16.mxu0 0
        %2819 = vmatpush2.bf16.msra.mxu0 0
        %2820 = vmatprep.subr.bf16.mxu0 0
        %2821 = vmatpush2.bf16.msra.mxu0 0
        %2822 = vmatprep.subr.bf16.mxu0 0
        %2823 = vmatpush2.bf16.msra.mxu0 0
        %2824 = vmatprep.mubr.bf16.mxu0 0
        %2825 = vmatmul.mubr.bf16.gmra.mxu0 %v2766
        %v2826 = vpop.f32.mrf.mxu0
        %v2827 = vadd.f32 0.0, %v2826
        %v2828 = vpop.f32.mrf.mxu0
        %v2829 = vpop.f32.mrf.mxu0
        %v2830 = vadd.f32 0.0, %v2829
        %v2831 = vpop.f32.mrf.mxu0
        %2832 = vmatprep.mubr.bf16.mxu0 0
        %2833 = vmatmul.mubr.bf16.gmra.mxu0 %v2769
        %v2834 = vpop.f32.mrf.mxu0
        %v2835 = vadd.f32 0.0, %v2834
        %v2836 = vpop.f32.mrf.mxu0
        %v2837 = vpop.f32.mrf.mxu0
        %v2838 = vadd.f32 0.0, %v2837
        %v2839 = vpop.f32.mrf.mxu0
        %2840 = vmatprep.mubr.bf16.mxu0 0
        %2841 = vmatmul.mubr.bf16.gmra.mxu0 %v2772
        %v2842 = vpop.f32.mrf.mxu0
        %v2843 = vadd.f32 0.0, %v2842
        %v2844 = vpop.f32.mrf.mxu0
        %v2845 = vpop.f32.mrf.mxu0
        %v2846 = vadd.f32 0.0, %v2845
        %v2847 = vpop.f32.mrf.mxu0
        %2848 = vmatprep.mubr.bf16.mxu0 0
        %2849 = vmatmul.mubr.bf16.gmra.mxu0 %v2775
        %v2850 = vpop.f32.mrf.mxu0
        %v2851 = vadd.f32 0.0, %v2850
        %v2852 = vpop.f32.mrf.mxu0
        %v2853 = vpop.f32.mrf.mxu0
        %v2854 = vadd.f32 0.0, %v2853
        %v2855 = vpop.f32.mrf.mxu0
        %2856 = vmatprep.mubr.bf16.mxu0 0
        %2857 = vmatmul.mubr.bf16.gmra.mxu0 %v2778
        %v2858 = vpop.f32.mrf.mxu0
        %v2859 = vadd.f32 0.0, %v2858
        %v2860 = vpop.f32.mrf.mxu0
        %v2861 = vpop.f32.mrf.mxu0
        %v2862 = vadd.f32 0.0, %v2861
        %v2863 = vpop.f32.mrf.mxu0
        %2864 = vmatprep.mubr.bf16.mxu0 0
        %2865 = vmatmul.mubr.bf16.gmra.mxu0 %v2781
        %v2866 = vpop.f32.mrf.mxu0
        %v2867 = vadd.f32 0.0, %v2866
        %v2868 = vpop.f32.mrf.mxu0
        %v2869 = vpop.f32.mrf.mxu0
        %v2870 = vadd.f32 0.0, %v2869
        %v2871 = vpop.f32.mrf.mxu0
        %2872 = vmatprep.mubr.bf16.mxu0 0
        %2873 = vmatmul.mubr.bf16.gmra.mxu0 %v2784
        %v2874 = vpop.f32.mrf.mxu0
        %v2875 = vadd.f32 0.0, %v2874
        %v2876 = vpop.f32.mrf.mxu0
        %v2877 = vpop.f32.mrf.mxu0
        %v2878 = vadd.f32 0.0, %v2877
        %v2879 = vpop.f32.mrf.mxu0
        %2880 = vmatprep.mubr.bf16.mxu0 0
        %2881 = vmatmul.mubr.bf16.gmra.mxu0 %v2787
        %v2882 = vpop.f32.mrf.mxu0
        %v2883 = vadd.f32 0.0, %v2882
        %v2884 = vpop.f32.mrf.mxu0
        %v2885 = vpop.f32.mrf.mxu0
        %v2886 = vadd.f32 0.0, %v2885
        %v2887 = vpop.f32.mrf.mxu0
        %2888 = vmatprep.mubr.bf16.mxu0 0
        %2889 = vmatmul.mubr.bf16.gmra.mxu0 %v2790
        %v2890 = vpop.f32.mrf.mxu0
        %v2891 = vadd.f32 0.0, %v2890
        %v2892 = vpop.f32.mrf.mxu0
        %v2893 = vpop.f32.mrf.mxu0
        %v2894 = vadd.f32 0.0, %v2893
        %v2895 = vpop.f32.mrf.mxu0
        %2896 = vdwg.mxu0
        %2905 = vrot.lane.b32.xlu0 %v2835, 96
        %v2906 = vpop.permute.xlu0 %2905
        %2907 = vrot.lane.b32.xlu0 %v2838, 96
        %v2908 = vpop.permute.xlu0 %2907
        %2909 = vrot.lane.b32.xlu0 %v2843, 96
        %v2910 = vpop.permute.xlu0 %2909
        %2911 = vrot.lane.b32.xlu0 %v2846, 96
        %v2912 = vpop.permute.xlu0 %2911
        %2913 = vrot.lane.b32.xlu0 %v2859, 96
        %v2914 = vpop.permute.xlu0 %2913
        %2915 = vrot.lane.b32.xlu0 %v2862, 96
        %v2916 = vpop.permute.xlu0 %2915
        %2917 = vrot.lane.b32.xlu0 %v2867, 96
        %v2918 = vpop.permute.xlu0 %2917
        %2919 = vrot.lane.b32.xlu0 %v2870, 96
        %v2920 = vpop.permute.xlu0 %2919
        %v2929 = vadd.f32 %v2827, %v2906
        %v2930 = vadd.f32 %v2830, %v2908
        %v2931 = vadd.f32 %v2835, %v2910
        %v2932 = vadd.f32 %v2838, %v2912
        %v2933 = vadd.f32 %v2851, %v2914
        %v2934 = vadd.f32 %v2854, %v2916
        %v2935 = vadd.f32 %v2859, %v2918
        %v2936 = vadd.f32 %v2862, %v2920
        %2943 = vrot.lane.b32.xlu0 %v2851, 64
        %v2944 = vpop.permute.xlu0 %2943
        %2945 = vrot.lane.b32.xlu0 %v2854, 64
        %v2946 = vpop.permute.xlu0 %2945
        %2947 = vrot.lane.b32.xlu0 %v2859, 64
        %v2948 = vpop.permute.xlu0 %2947
        %2949 = vrot.lane.b32.xlu0 %v2862, 64
        %v2950 = vpop.permute.xlu0 %2949
        %2951 = vrot.lane.b32.xlu0 %v2875, 64
        %v2952 = vpop.permute.xlu0 %2951
        %2953 = vrot.lane.b32.xlu0 %v2878, 64
        %v2954 = vpop.permute.xlu0 %2953
        %2955 = vrot.lane.b32.xlu0 %v2883, 64
        %v2956 = vpop.permute.xlu0 %2955
        %2957 = vrot.lane.b32.xlu0 %v2886, 64
        %v2958 = vpop.permute.xlu0 %2957
        %v2967 = vadd.f32 %v2929, %v2944
        %v2968 = vadd.f32 %v2930, %v2946
        %v2969 = vadd.f32 %v2931, %v2948
        %v2970 = vadd.f32 %v2932, %v2950
        %v2971 = vadd.f32 %v2933, %v2952
        %v2972 = vadd.f32 %v2934, %v2954
        %v2973 = vadd.f32 %v2935, %v2956
        %v2974 = vadd.f32 %v2936, %v2958
        %2977 = vrot.lane.b32.xlu0 %v2859, 32
        %v2978 = vpop.permute.xlu0 %2977
        %2979 = vrot.lane.b32.xlu0 %v2862, 32
        %v2980 = vpop.permute.xlu0 %2979
        %2981 = vrot.lane.b32.xlu0 %v2867, 32
        %v2982 = vpop.permute.xlu0 %2981
        %2983 = vrot.lane.b32.xlu0 %v2870, 32
        %v2984 = vpop.permute.xlu0 %2983
        %2985 = vrot.lane.b32.xlu0 %v2883, 32
        %v2986 = vpop.permute.xlu0 %2985
        %2987 = vrot.lane.b32.xlu0 %v2886, 32
        %v2988 = vpop.permute.xlu0 %2987
        %2989 = vrot.lane.b32.xlu0 %v2891, 32
        %v2990 = vpop.permute.xlu0 %2989
        %2991 = vrot.lane.b32.xlu0 %v2894, 32
        %v2992 = vpop.permute.xlu0 %2991
        %v3001 = vadd.f32 %v2967, %v2978
        %v3002 = vadd.f32 %v2968, %v2980
        %v3003 = vadd.f32 %v2969, %v2982
        %v3004 = vadd.f32 %v2970, %v2984
        %v3005 = vadd.f32 %v2971, %v2986
        %v3006 = vadd.f32 %v2972, %v2988
        %v3007 = vadd.f32 %v2973, %v2990
        %v3008 = vadd.f32 %v2974, %v2992
        %3011 = vrot.lane.b32.xlu0 %v3003, 32
        %v3012 = vpop.permute.xlu0 %3011
        %3013 = vrot.lane.b32.xlu0 %v3004, 32
        %v3014 = vpop.permute.xlu0 %3013
        %3019 = vrot.lane.b32.xlu0 %v3005, 64
        %v3020 = vpop.permute.xlu0 %3019
        %3021 = vrot.lane.b32.xlu0 %v3006, 64
        %v3022 = vpop.permute.xlu0 %3021
        %3027 = vrot.lane.b32.xlu0 %v3007, 96
        %v3028 = vpop.permute.xlu0 %3027
        %3029 = vrot.lane.b32.xlu0 %v3008, 96
        %v3030 = vpop.permute.xlu0 %3029
        %v3033 = vsel %vm2643, %v3001, %v3012
        %v3034 = vsel %vm2643, %v3002, %v3014
        %v3035 = vsel %vm2764, %v3033, %v3020
        %v3036 = vsel %vm2764, %v3034, %v3022
        %vm3037 = vcmask 785408
        %v3038 = vsel %vm3037, %v3035, %v3028
        %v3039 = vsel %vm3037, %v3036, %v3030
        %v3040 = vld [vmem:[%s4] sm:$0x1]
        %v3042 = vlaneseq
        %v3043 = vshrl.u32 %v3042, 7
        %v3044 = vsub.s32 0, %v3043
        %v3045 = vrot.slane %v3040, %v3044
        %v3047 = vadd.f32 %v3038, %v3045
        %v3048 = vadd.f32 %v3039, %v3045
        %v3049 = vmax.f32 %v3047, 0.0
        %v3050 = vmax.f32 %v3048, 0.0
        %v3051 = vpack.c.bf16 %v3050, %v3049
        %v3052 = vld [vmem:[%s5] sm:$0xf]
        %v3053 = vld [vmem:[%s5 + $0x4] sm:$0xf]
        %v3054 = vld [vmem:[%s5 + $0x8] sm:$0xf]
        %v3055 = vld [vmem:[%s5 + $0xc] sm:$0xf]
        %v3056 = vld [vmem:[%s5 + $0x10] sm:$0xf]
        %v3057 = vld [vmem:[%s5 + $0x14] sm:$0xf]
        %v3058 = vld [vmem:[%s5 + $0x18] sm:$0xf]
        %v3059 = vld [vmem:[%s5 + $0x1c] sm:$0xf]
        %v3060 = vld [vmem:[%s5 + $0x20] sm:$0xf]
        %v3061 = vld [vmem:[%s5 + $0x24] sm:$0xf]
        %v3062 = vld [vmem:[%s5 + $0x28] sm:$0xf]
        %v3063 = vld [vmem:[%s5 + $0x2c] sm:$0xf]
        %v3064 = vld [vmem:[%s5 + $0x30] sm:$0xf]
        %v3065 = vld [vmem:[%s5 + $0x34] sm:$0xf]
        %v3066 = vld [vmem:[%s5 + $0x38] sm:$0xf]
        %v3067 = vld [vmem:[%s5 + $0x3c] sm:$0xf]
        %v3068 = vld [vmem:[%s6] sm:$0x1]
        %v3070 = vlaneseq
        %v3071 = vshrl.u32 %v3070, 7
        %v3072 = vsub.s32 0, %v3071
        %v3073 = vrot.slane %v3068, %v3072
        %v3091 = vunpack.c.l.b16 %v3052
        %v3092 = vunpack.c.l.b16 %v3053
        %v3093 = vunpack.c.l.b16 %v3054
        %v3094 = vunpack.c.l.b16 %v3055
        %v3095 = vunpack.c.l.b16 %v3056
        %v3096 = vunpack.c.l.b16 %v3057
        %v3097 = vunpack.c.l.b16 %v3058
        %v3098 = vunpack.c.l.b16 %v3059
        %v3099 = vunpack.c.l.b16 %v3060
        %v3100 = vunpack.c.l.b16 %v3061
        %v3101 = vunpack.c.l.b16 %v3062
        %v3102 = vunpack.c.l.b16 %v3063
        %v3103 = vunpack.c.l.b16 %v3064
        %v3104 = vunpack.c.l.b16 %v3065
        %v3105 = vunpack.c.l.b16 %v3066
        %v3106 = vunpack.c.l.b16 %v3067
        %v3107 = vpack.c.b16 %v3092, %v3091
        %v3108 = vpack.c.b16 %v3094, %v3093
        %v3109 = vpack.c.b16 %v3096, %v3095
        %v3110 = vpack.c.b16 %v3098, %v3097
        %v3111 = vpack.c.b16 %v3100, %v3099
        %v3112 = vpack.c.b16 %v3102, %v3101
        %v3113 = vpack.c.b16 %v3104, %v3103
        %v3114 = vpack.c.b16 %v3106, %v3105
        %3123 = vmatprep.subr.bf16.mxu0 0
        %3124 = vmatpush1.bf16.msra.mxu0 %v3114
        %3125 = vmatprep.subr.bf16.mxu0 0
        %3126 = vmatpush1.bf16.msra.mxu0 %v3113
        %3127 = vmatprep.subr.bf16.mxu0 0
        %3128 = vmatpush1.bf16.msra.mxu0 %v3112
        %3129 = vmatprep.subr.bf16.mxu0 0
        %3130 = vmatpush1.bf16.msra.mxu0 %v3111
        %3131 = vmatprep.subr.bf16.mxu0 0
        %3132 = vmatpush1.bf16.msra.mxu0 %v3110
        %3133 = vmatprep.subr.bf16.mxu0 0
        %3134 = vmatpush1.bf16.msra.mxu0 %v3109
        %3135 = vmatprep.subr.bf16.mxu0 0
        %3136 = vmatpush1.bf16.msra.mxu0 %v3108
        %3137 = vmatprep.subr.bf16.mxu0 0
        %3138 = vmatpush1.bf16.msra.mxu0 %v3107
        %3139 = vmatprep.subr.bf16.mxu0 0
        %3140 = vmatpush2.bf16.msra.mxu0 0
        %3141 = vmatprep.subr.bf16.mxu0 0
        %3142 = vmatpush2.bf16.msra.mxu0 0
        %3143 = vmatprep.subr.bf16.mxu0 0
        %3144 = vmatpush2.bf16.msra.mxu0 0
        %3145 = vmatprep.subr.bf16.mxu0 0
        %3146 = vmatpush2.bf16.msra.mxu0 0
        %3147 = vmatprep.subr.bf16.mxu0 0
        %3148 = vmatpush2.bf16.msra.mxu0 0
        %3149 = vmatprep.subr.bf16.mxu0 0
        %3150 = vmatpush2.bf16.msra.mxu0 0
        %3151 = vmatprep.subr.bf16.mxu0 0
        %3152 = vmatpush2.bf16.msra.mxu0 0
        %3153 = vmatprep.subr.bf16.mxu0 0
        %3154 = vmatpush2.bf16.msra.mxu0 0
        %3155 = vmatprep.mubr.bf16.mxu0 0
        %3156 = vmatmul.mubr.bf16.gmra.mxu0 %v3051
        %v3157 = vpop.f32.mrf.mxu0
        %v3158 = vadd.f32 %v3073, %v3157
        %v3159 = vpop.f32.mrf.mxu0
        %v3160 = vpop.f32.mrf.mxu0
        %v3161 = vadd.f32 %v3073, %v3160
        %v3162 = vpop.f32.mrf.mxu0
        %3163 = vdwg.mxu0
        %3164 = vst [vmem:[%s700] sm:$0xff] %v3158
        %3165 = vst [vmem:[%s700 + $0x8] sm:$0xff] %v3161
        %s3166 = sand.u32 %s181, 1
        %s3167 = scalar_lea.sflag [#allocation4], %s3166
        %s3168 = sand.u32 %s181, 1
        %s3169 = smul.addr %s3168, 16
        %s3170 = scalar_lea.vmem [#allocation3], %s3169
        // Predicated region
        $region87: #{conv4_encoder_forward.1} parent=81 // pred_check
          %p3171 = pneg %p191
        $region88: #{conv4_encoder_forward.1} parent=81 // pred_check_branch
          %3173 = sbr.rel (%p3171) target = $region90
        $region89: #{conv4_encoder_forward.1} parent=81 // pred_region
          %s3174 = smul.u32 2, %s21
          %s3176 = ssub.s32 256, 256
          %3177 = vsyncadd %s3167, %s3176
          %s3178 = smul.addr %s3174, 128
          %s3179 = scalar_lea.hbm %s7, %s3178
          %s3180 = sshll.u32 %s3170, 4
          %s3181 = int_to_ptr.vmem [resolvable:$true] %s3180
          %3186 = dma.vmem_to_hbm [thread:$0]  %s3181, 256, %s3179, %s3167, 128, 128, 8
        $region90: #{conv4_encoder_forward.1} parent=81 // pred_fallthru
          _
      $region82: #{conv4_encoder_forward.1} parent=5 // pred_fallthru
        _
      %p3187 = scmp.le.s32.totalorder 2, %s16
      // Predicated region
      $region91: #{conv4_encoder_forward.1} parent=5 // pred_check
        %p3188 = pneg %p3187
      $region92: #{conv4_encoder_forward.1} parent=5 // pred_check_branch
        %3190 = sbr.rel (%p3188) target = $region94
      $region93: #{conv4_encoder_forward.1} parent=5 // pred_region
        %s3191 = ssub.s32 %s16, 2
        // Predicated region
        $region95: #{conv4_encoder_forward.1} parent=93 // pred_check
          %p3192 = pneg %p197
        $region96: #{conv4_encoder_forward.1} parent=93 // pred_check_branch
          %3194 = sbr.rel (%p3192) target = $region98
        $region97: #{conv4_encoder_forward.1} parent=93 // pred_region
          %s3195 = sand.u32 %s182, 1
          %s3196 = scalar_lea.sflag [#allocation4], %s3195
          %s3197 = sand.u32 %s182, 1
          %s3198 = smul.addr %s3197, 16
          %s3199 = scalar_lea.vmem [#allocation3], %s3198
          %3200 = dma.done %s3196, 256
        $region98: #{conv4_encoder_forward.1} parent=93 // pred_fallthru
          _
      $region94: #{conv4_encoder_forward.1} parent=5 // pred_fallthru
        _
    $region6: #{conv4_encoder_forward.1} parent=1 // loop_footer
      %s20 = sadd.s32 1, %s16
    $region7: #{conv4_encoder_forward.1} parent=1 // loop_footer_branch
      %15 = sbr.rel target = $region3
    $region8: #{conv4_encoder_forward.1} parent=1 // loop_exit
      _
    %3201 = vsyncpa [#allocation4], 1
    %s3202 = scalar_lea.sflag [#allocation4], 1
    %3203 = vsyncpa %s3202, 1

</llo_original>
